<compile_context>
chip_gen: v5e
topology: v5e:2x2
jax: 0.10.0
libtpu: 0.0.40
codegen_flags: <defaults>
</compile_context>

<pallas_src>
import functools

import jax
import jax.numpy as jnp
from jax import lax
from jax.experimental import pallas as pl
from jax.experimental.pallas import tpu as pltpu

LANE = 128
SUB = 8

# MXU input precision for patches / weights.  bf16 is the recommended setting on
# all TPU generations; set to jnp.float32 for a strict-f32 numerical path (the
# correctness check below then tightens to 1e-3).
MXU_DTYPE = jnp.bfloat16


def _round_up(x, m):
    return (x + m - 1) // m * m


def _cdiv(a, b):
    return -(-a // b)


# ----------------------------------------------------------------------------
# Hardware-aware knobs
# ----------------------------------------------------------------------------
@functools.lru_cache(maxsize=None)
def _vmem_limit_bytes():
    cap = 64 * 1024 * 1024                      # conservative default (v7x per-TC)
    try:
        info = pltpu.get_tpu_info()
        for name in ("vmem_capacity_bytes", "vmem_size_bytes", "vmem_bytes"):
            v = getattr(info, name, None)
            if v:
                cap = int(v)
                break
    except Exception:
        pass
    # Scoped compiler limit: half of physical VMEM (64 MiB on 128 MiB v5e/v6e,
    # 32 MiB on 64 MiB v7x), capped at 96 MiB.
    return int(min(cap // 2, 96 * 1024 * 1024))


_BUFFERED_ONE = None


def _probe_buffered_one():
    """True iff pipeline_mode=pl.Buffered(1) constructs, lowers and runs here."""
    try:
        inv_spec = pl.BlockSpec((SUB, LANE), lambda i: (0, 0),
                                pipeline_mode=pl.Buffered(1))
    except Exception:
        return False

    def _copy(x_ref, o_ref):
        o_ref[...] = x_ref[...]

    try:
        fn = pl.pallas_call(
            _copy,
            out_shape=jax.ShapeDtypeStruct((2 * SUB, LANE), jnp.float32),
            grid_spec=pltpu.PrefetchScalarGridSpec(
                num_scalar_prefetch=0, grid=(2,),
                in_specs=[inv_spec],
                out_specs=pl.BlockSpec((SUB, LANE), lambda i: (i, 0))))
        jax.block_until_ready(fn(jnp.ones((SUB, LANE), jnp.float32)))
        return True
    except Exception:
        return False


def _use_buffered_one():
    global _BUFFERED_ONE
    if _BUFFERED_ONE is None:
        _BUFFERED_ONE = _probe_buffered_one()
    return _BUFFERED_ONE


def _resident_spec(block_shape):
    """BlockSpec for a grid-invariant block; single-buffered when supported so a
    large resident weight block does not eat 2x VMEM (matters on v7x's 64 MiB)."""
    nd = len(block_shape)
    index_map = lambda m: (0,) * nd
    if _use_buffered_one():
        return pl.BlockSpec(block_shape, index_map, pipeline_mode=pl.Buffered(1))
    return pl.BlockSpec(block_shape, index_map)


def _choose_m_tiling(M, Kp, Cp, Cout, vmem_limit):
    """Pick the M (=N*Ho*Wo) tile so the kernel-1 working set fits VMEM and the
    grid has >=2 tiles so "parallel" can shard across both v7x TensorCores."""
    mxu_bytes = jnp.dtype(MXU_DTYPE).itemsize
    resident = Kp * Cp * mxu_bytes * 2                       # weights, worst case x2
    per_row = Kp * mxu_bytes * 2 + Cout * 4 * 2 + Cp * 4     # patches x2, y x2, acc
    budget = max(int(vmem_limit * 0.6) - resident, per_row * SUB)
    tm_max = max(SUB, min(2048, (budget // per_row) // SUB * SUB))
    mt = _cdiv(M, tm_max)
    if M >= 2 * SUB:
        mt = max(2, mt)
        mt += mt % 2                                         # even tile count
    tm = _round_up(_cdiv(M, mt), SUB)
    mt = _cdiv(M, tm)            # re-derive: padded rows land only in the last tile
    return tm, mt, tm * mt


# ----------------------------------------------------------------------------
# Kernel 1: y = patches @ W [+ bias] [+ per-tile BN partial stats]
# ----------------------------------------------------------------------------
def _make_matmul_kernel(*, cout, cp, add_bias, apply_relu, compute_stats,
                        tm, m_valid, mt):
    slice_c = cout != cp
    n_last = m_valid - (mt - 1) * tm             # valid rows in the last M tile
    need_mask = compute_stats and (n_last != tm)

    def kernel(*refs):
        p_ref, w_ref = refs[0], refs[1]
        idx = 2
        if add_bias:
            b_ref = refs[idx]
            idx += 1
        y_ref = refs[idx]
        idx += 1
        s_ref = refs[idx] if compute_stats else None

        y = jnp.dot(p_ref[...], w_ref[...], preferred_element_type=jnp.float32)
        if slice_c:
            y = y[:, :cout]                      # drop zero-padded output channels
        if add_bias:
            y = y + b_ref[...]
        if apply_relu:
            y = jnp.maximum(y, 0.0)
        y_ref[...] = y.astype(y_ref.dtype)

        if compute_stats:
            # Per-tile (sum, centered sum-of-squares); combined outside with the
            # chunked parallel-variance formula -> no E[y^2]-E[y]^2 cancellation.
            def emit(mask, n):
                ym = y if mask is None else jnp.where(mask, y, 0.0)
                s0 = jnp.sum(ym, axis=0, keepdims=True)          # (1, cout)
                mu = s0 * (1.0 / max(n, 1))
                d = (y - mu) if mask is None else jnp.where(mask, y - mu, 0.0)
                q = jnp.sum(d * d, axis=0, keepdims=True)        # (1, cout)
                s_ref[...] = jnp.concatenate([s0, q], axis=0)[None]   # (1, 2, cout)

            if need_mask:
                last = mt - 1

                @pl.when(pl.program_id(0) != last)
                def _():
                    emit(None, tm)

                @pl.when(pl.program_id(0) == last)
                def _():
                    rows = lax.broadcasted_iota(jnp.int32, y.shape, 0)
                    emit(rows < n_last, n_last)
            else:
                emit(None, tm)

    return kernel


def _conv_matmul_pallas(patches, w, bias_row, *, cout, compute_stats, apply_relu,
                        m_valid, tm, y_dtype, vmem_limit):
    Mp, Kp = patches.shape
    Cp = w.shape[1]
    mt = Mp // tm
    add_bias = bias_row is not None
    kernel = _make_matmul_kernel(cout=cout, cp=Cp, add_bias=add_bias,
                                 apply_relu=apply_relu, compute_stats=compute_stats,
                                 tm=tm, m_valid=m_valid, mt=mt)

    in_specs = [pl.BlockSpec((tm, Kp), lambda m: (m, 0)),     # patch tile, pipelined
                _resident_spec((Kp, Cp))]                     # weights, grid-invariant
    args = [patches, w]
    if add_bias:
        in_specs.append(_resident_spec((1, cout)))
        args.append(bias_row)

    y_shape = jax.ShapeDtypeStruct((Mp, cout), y_dtype)
    y_spec = pl.BlockSpec((tm, cout), lambda m: (m, 0))
    if compute_stats:
        out_shape = (y_shape, jax.ShapeDtypeStruct((mt, 2, cout), jnp.float32))
        out_specs = (y_spec, pl.BlockSpec((1, 2, cout), lambda m: (m, 0, 0)))
    else:
        out_shape, out_specs = y_shape, y_spec

    return pl.pallas_call(
        kernel,
        out_shape=out_shape,
        grid_spec=pltpu.PrefetchScalarGridSpec(
            num_scalar_prefetch=0, grid=(mt,),
            in_specs=in_specs, out_specs=out_specs),
        compiler_params=pltpu.CompilerParams(
            dimension_semantics=("parallel",),
            vmem_limit_bytes=vmem_limit),
    )(*args)


# ----------------------------------------------------------------------------
# Kernel 2: o = y * scale + shift (+ residual) (ReLU)
# ----------------------------------------------------------------------------
def _make_affine_res_relu_kernel(add_residual, apply_relu):
    def kernel(*refs):
        if add_residual:
            y_ref, ss_ref, r_ref, o_ref = refs
        else:
            y_ref, ss_ref, o_ref = refs
            r_ref = None
        ss = ss_ref[...]                          # (2, C): row 0 = scale, row 1 = shift
        o = y_ref[...].astype(jnp.float32) * ss[0:1, :] + ss[1:2, :]
        if add_residual:
            o = o + r_ref[...].astype(jnp.float32)
        if apply_relu:
            o = jnp.maximum(o, 0.0)
        o_ref[...] = o.astype(o_ref.dtype)
    return kernel


def _affine_res_relu_pallas(y, scale_shift, residual, *, apply_relu, tm, vmem_limit):
    Mp, Co = y.shape
    mt = Mp // tm
    add_residual = residual is not None
    kernel = _make_affine_res_relu_kernel(add_residual, apply_relu)

    in_specs = [pl.BlockSpec((tm, Co), lambda m: (m, 0)),
                _resident_spec((2, Co))]
    args = [y, scale_shift]
    if add_residual:
        in_specs.append(pl.BlockSpec((tm, Co), lambda m: (m, 0)))
        args.append(residual)

    return pl.pallas_call(
        kernel,
        out_shape=jax.ShapeDtypeStruct((Mp, Co), jnp.float32),
        grid_spec=pltpu.PrefetchScalarGridSpec(
            num_scalar_prefetch=0, grid=(mt,),
            in_specs=in_specs,
            out_specs=pl.BlockSpec((tm, Co), lambda m: (m, 0))),
        compiler_params=pltpu.CompilerParams(
            dimension_semantics=("parallel",),
            vmem_limit_bytes=vmem_limit),
    )(*args)


# ----------------------------------------------------------------------------
# JAX glue: im2col + per-conv driver
# ----------------------------------------------------------------------------
def _im2col_matrix(x_nhwc, ksize, stride, padding):
    N, H, W, C = x_nhwc.shape
    xp = jnp.pad(x_nhwc, ((0, 0), (padding, padding), (padding, padding), (0, 0)))
    Ho = (H + 2 * padding - ksize) // stride + 1
    Wo = (W + 2 * padding - ksize) // stride + 1
    taps = []
    for dy in range(ksize):
        for dx in range(ksize):
            p = xp[:, dy:dy + stride * (Ho - 1) + 1:stride,
                      dx:dx + stride * (Wo - 1) + 1:stride, :]
            taps.append(p.reshape(N * Ho * Wo, C))
    return jnp.concatenate(taps, axis=-1), Ho, Wo       # (M, K*K*C)


def _conv_layer(x_nhwc, w_hwio, bias, gamma, beta, *, ksize, stride, padding,
                apply_bn, apply_relu, residual_nhwc=None, eps=1e-5):
    N = x_nhwc.shape[0]
    Cin, Cout = int(w_hwio.shape[2]), int(w_hwio.shape[3])

    # TODO(synk): form the K*K taps from a haloed, VMEM-resident input tile inside
    # the kernel (manual pl.ANY + make_async_copy halo DMA) to remove the ~K^2 x
    # im2col HBM expansion entirely; kept as XLA glue here (already halved by
    # emitting the patches in bf16).
    pat, Ho, Wo = _im2col_matrix(x_nhwc.astype(MXU_DTYPE), ksize, stride, padding)
    M = N * Ho * Wo
    Kc = ksize * ksize * Cin
    Cp = _round_up(Cout, LANE)          # lane-dense MXU output columns
    Kp = _round_up(Kc, LANE)            # lane-dense patch rows / contraction dim
    vmem_limit = _vmem_limit_bytes()
    tm, mt, Mp = _choose_m_tiling(M, Kp, Cp, Cout, vmem_limit)

    pat = jnp.pad(pat, ((0, Mp - M), (0, Kp - Kc)))
    w = jnp.pad(w_hwio.reshape(Kc, Cout).astype(MXU_DTYPE),
                ((0, Kp - Kc), (0, Cp - Cout)))

    if not apply_bn:
        # ResSect shortcut conv: plain conv + bias (no BN / residual / ReLU).
        bias_row = bias.reshape(1, Cout).astype(jnp.float32)
        out = _conv_matmul_pallas(pat, w, bias_row, cout=Cout, compute_stats=False,
                                  apply_relu=apply_relu, m_valid=M, tm=tm,
                                  y_dtype=jnp.float32, vmem_limit=vmem_limit)
        return out[:M].reshape(N, Ho, Wo, Cout)

    # BN path: the conv bias is exactly cancelled by BN's mean subtraction -> skip it.
    # TODO(synk): for small-K layers on v7x, recomputing the matmul in pass 2 (or
    # storing y in bf16) would cut the kernel-1 -> kernel-2 HBM round trip further.
    y, part = _conv_matmul_pallas(pat, w, None, cout=Cout, compute_stats=True,
                                  apply_relu=False, m_valid=M, tm=tm,
                                  y_dtype=jnp.float32, vmem_limit=vmem_limit)

    # Chunked parallel-variance combine of the per-tile centered partials
    # (training-mode BatchNorm: biased variance over all N*Ho*Wo rows).
    n_last = M - (mt - 1) * tm
    counts = jnp.asarray([float(tm)] * (mt - 1) + [float(max(n_last, 1))],
                         dtype=jnp.float32)
    weights_n = jnp.asarray([float(tm)] * (mt - 1) + [float(n_last)],
                            dtype=jnp.float32)
    s = part[:, 0, :]                                     # (mt, Cout) per-tile sums
    q = part[:, 1, :]                                     # (mt, Cout) centered SS
    tile_mean = s / counts[:, None]
    mean = jnp.sum(s, axis=0) / M
    ss_between = jnp.sum(weights_n[:, None] * jnp.square(tile_mean - mean[None, :]),
                         axis=0)
    var = jnp.maximum((jnp.sum(q, axis=0) + ss_between) / M, 0.0)
    scale = gamma * lax.rsqrt(var + eps)
    shift = beta - mean * scale
    scale_shift = jnp.stack([scale, shift]).astype(jnp.float32)      # (2, Cout)

    res = None
    if residual_nhwc is not None:
        if residual_nhwc.shape != (N, Ho, Wo, Cout):
            # Mirrors torch.add failing when the shortcut channel count mismatches.
            raise ValueError("residual shape mismatch: %s vs %s"
                             % (residual_nhwc.shape, (N, Ho, Wo, Cout)))
        res = jnp.pad(residual_nhwc.reshape(M, Cout).astype(jnp.float32),
                      ((0, Mp - M), (0, 0)))

    out = _affine_res_relu_pallas(y, scale_shift, res, apply_relu=apply_relu,
                                  tm=tm, vmem_limit=vmem_limit)
    return out[:M].reshape(N, Ho, Wo, Cout)


def res_sect_forward(x_nchw, params, n_residual_blocks, beginning_stride):
    """Mirrors ResSect.forward (training-mode BatchNorm). x_nchw: (N, in_size, H, W)."""
    x = jnp.transpose(x_nchw, (0, 2, 3, 1)).astype(jnp.float32)    # NHWC
    gamma, beta = params["bn_gamma"], params["bn_beta"]
    x_res = x
    for i in range(n_residual_blocks):
        if i == 0:
            if beginning_stride == 1:
                x0 = x_res
            else:
                x0 = _conv_layer(x_res, params["w_sc"], params["b_sc"],
                                 gamma, beta, ksize=1, stride=beginning_stride,
                                 padding=0, apply_bn=False, apply_relu=False)
            y = _conv_layer(x_res, params["w0"], params["b0"], gamma, beta,
                            ksize=3, stride=beginning_stride, padding=1,
                            apply_bn=True, apply_relu=True)
            y = _conv_layer(y, params["w1"], params["b1"], gamma, beta,
                            ksize=3, stride=1, padding=1,
                            apply_bn=True, apply_relu=True, residual_nhwc=x0)
            x_res = y
        else:
            x0 = x_res
            y = _conv_layer(x_res, params["w1"], params["b1"], gamma, beta,
                            ksize=3, stride=1, padding=1,
                            apply_bn=True, apply_relu=True)
            y = _conv_layer(y, params["w1"], params["b1"], gamma, beta,
                            ksize=3, stride=1, padding=1,
                            apply_bn=True, apply_relu=True, residual_nhwc=x0)
            x_res = y
    return jnp.transpose(x_res, (0, 3, 1, 2))    # back to NCHW


# ----------------------------------------------------------------------------
# Reference (correctness check).  MXU operands are cast to MXU_DTYPE exactly as
# the kernel does, so the check isolates implementation errors; with
# MXU_DTYPE=float32 this is a strict f32 reference.
# ----------------------------------------------------------------------------
def _ref_conv(x, w, b, stride, padding):
    y = lax.conv_general_dilated(
        x.astype(MXU_DTYPE), w.astype(MXU_DTYPE), (stride, stride),
        [(padding, padding), (padding, padding)],
        dimension_numbers=("NHWC", "HWIO", "NHWC"),
        preferred_element_type=jnp.float32)
    return y + b


def _ref_bn(x, gamma, beta, eps=1e-5):
    mean = jnp.mean(x, axis=(0, 1, 2), keepdims=True)
    var = jnp.mean(jnp.square(x - mean), axis=(0, 1, 2), keepdims=True)
    return (x - mean) * lax.rsqrt(var + eps) * gamma + beta


def res_sect_reference(x_nchw, params, n_residual_blocks, beginning_stride):
    x = jnp.transpose(x_nchw, (0, 2, 3, 1)).astype(jnp.float32)
    g, be = params["bn_gamma"], params["bn_beta"]
    x_res = x
    for i in range(n_residual_blocks):
        if i == 0:
            x0 = (x_res if beginning_stride == 1
                  else _ref_conv(x_res, params["w_sc"], params["b_sc"],
                                 beginning_stride, 0))
            y = jnp.maximum(_ref_bn(_ref_conv(x_res, params["w0"], params["b0"],
                                              beginning_stride, 1), g, be), 0.0)
            y = _ref_bn(_ref_conv(y, params["w1"], params["b1"], 1, 1), g, be)
            x_res = jnp.maximum(x0 + y, 0.0)
        else:
            x0 = x_res
            y = jnp.maximum(_ref_bn(_ref_conv(x_res, params["w1"], params["b1"],
                                              1, 1), g, be), 0.0)
            y = _ref_bn(_ref_conv(y, params["w1"], params["b1"], 1, 1), g, be)
            x_res = jnp.maximum(x0 + y, 0.0)
    return jnp.transpose(x_res, (0, 3, 1, 2))


# ----------------------------------------------------------------------------
# Main
# ----------------------------------------------------------------------------
if __name__ == "__main__":
    # Module config: n_filter=8 -> in_size = n_filter // 2 = 4
    n_filter = 8
    in_size = 32 if n_filter == 32 else n_filter // 2
    n_residual_blocks = 2
    beginning_stride = 2

    N, H, W = 2, 16, 16
    ks = jax.random.split(jax.random.PRNGKey(0), 9)

    params = {
        "w0":   jax.random.normal(ks[0], (3, 3, in_size, n_filter), jnp.float32) * 0.1,
        "b0":   jax.random.normal(ks[1], (n_filter,), jnp.float32) * 0.1,
        "w1":   jax.random.normal(ks[2], (3, 3, n_filter, n_filter), jnp.float32) * 0.1,
        "b1":   jax.random.normal(ks[3], (n_filter,), jnp.float32) * 0.1,
        "w_sc": jax.random.normal(ks[4], (1, 1, in_size, n_filter), jnp.float32) * 0.1,
        "b_sc": jax.random.normal(ks[5], (n_filter,), jnp.float32) * 0.1,
        "bn_gamma": 1.0 + 0.1 * jax.random.normal(ks[6], (n_filter,), jnp.float32),
        "bn_beta": 0.1 * jax.random.normal(ks[7], (n_filter,), jnp.float32),
    }
    x = jax.random.normal(ks[8], (N, in_size, H, W), jnp.float32)

    _use_buffered_one()   # probe pl.Buffered(1) support outside the jit trace

    fwd = jax.jit(functools.partial(res_sect_forward,
                                    n_residual_blocks=n_residual_blocks,
                                    beginning_stride=beginning_stride))
    out = jax.block_until_ready(fwd(x, params))

    ref = jax.block_until_ready(
        res_sect_reference(x, params, n_residual_blocks, beginning_stride))

    assert out.shape == (N, n_filter, H // beginning_stride, W // beginning_stride)
    # bf16 MXU operands: allow one-ulp re-quantization divergence of intermediate
    # activations between the kernel path and the reference conv path.
    tol = 1e-3 if MXU_DTYPE == jnp.float32 else 1e-2
    assert jnp.allclose(out, ref, rtol=tol, atol=tol), "mismatch vs reference"

    print("KERNEL_OK")
</pallas_src>

<mosaic_0001>
module attributes {stable_mosaic.version = 11 : i64} {
  func.func @_copy(%arg0: i32, %arg1: memref<8x128xf32, #tpu.memory_space<vmem>>, %arg2: memref<8x128xf32, #tpu.memory_space<vmem>>) attributes {dimension_semantics = [#tpu.dimension_semantics<arbitrary>], iteration_bounds = array<i64: 2>, scalar_prefetch = 0 : i64, scratch_operands = 0 : i64, tpu.core_type = #tpu.core_type<tc>, window_params = [{pipeline_mode = #tpu.pipeline_mode<synchronous>, transform_indices = @transform_0, window_bounds = array<i64: 8, 128>}, {transform_indices = @transform_1, window_bounds = array<i64: 8, 128>}]} {
    %c0 = arith.constant 0 : index
    %c0_0 = arith.constant 0 : index
    %0 = vector.load %arg1[%c0, %c0_0] : memref<8x128xf32, #tpu.memory_space<vmem>>, vector<8x128xf32>
    %c0_1 = arith.constant 0 : index
    %c0_2 = arith.constant 0 : index
    %1 = vector.load %arg2[%c0_1, %c0_2] : memref<8x128xf32, #tpu.memory_space<vmem>>, vector<8x128xf32>
    tpu.vector_store %arg2[%c0_1, %c0_2], %0 {strides = array<i32>} : memref<8x128xf32, #tpu.memory_space<vmem>>, vector<8x128xf32>,
    return
  }
  func.func @transform_0(%arg0: i32) -> (i32, i32) {
    %c0_i32 = arith.constant 0 : i32
    %c0_i32_0 = arith.constant 0 : i32
    %c0_i32_1 = arith.constant 0 : i32
    return %c0_i32, %c0_i32_0 : i32, i32
  }
  func.func @transform_1(%arg0: i32) -> (i32, i32) {
    %c0_i32 = arith.constant 0 : i32
    %c0_i32_0 = arith.constant 0 : i32
    return %arg0, %c0_i32 : i32, i32
  }
}

module attributes {stable_mosaic.version = 11 : i64} {
  func.func @kernel(%arg0: i32, %arg1: memref<64x128xbf16, #tpu.memory_space<vmem>>, %arg2: memref<128x128xbf16, #tpu.memory_space<vmem>>, %arg3: memref<1x8xf32, #tpu.memory_space<vmem>>, %arg4: memref<64x8xf32, #tpu.memory_space<vmem>>) attributes {dimension_semantics = [#tpu.dimension_semantics<parallel>], iteration_bounds = array<i64: 2>, scalar_prefetch = 0 : i64, scratch_operands = 0 : i64, tpu.core_type = #tpu.core_type<tc>, window_params = [{transform_indices = @transform_0, window_bounds = array<i64: 64, 128>}, {pipeline_mode = #tpu.pipeline_mode<synchronous>, transform_indices = @transform_1, window_bounds = array<i64: 128, 128>}, {pipeline_mode = #tpu.pipeline_mode<synchronous>, transform_indices = @transform_2, window_bounds = array<i64: 1, 8>}, {transform_indices = @transform_3, window_bounds = array<i64: 64, 8>}]} {
    %c0 = arith.constant 0 : index
    %c0_0 = arith.constant 0 : index
    %0 = vector.load %arg1[%c0, %c0_0] : memref<64x128xbf16, #tpu.memory_space<vmem>>, vector<64x128xbf16>
    %c0_1 = arith.constant 0 : index
    %c0_2 = arith.constant 0 : index
    %1 = vector.load %arg2[%c0_1, %c0_2] : memref<128x128xbf16, #tpu.memory_space<vmem>>, vector<128x128xbf16>
    %cst = arith.constant dense<0.000000e+00> : vector<64x128xf32>
    %2 = tpu.matmul %0, %1, %cst {dimension_numbers = #tpu.dot_dimension_numbers<[1], [0], [0], [1], [0, 0, 1, 1], [], []>} : vector<64x128xbf16>, vector<128x128xbf16>, vector<64x128xf32> -> vector<64x128xf32>
    %3 = vector.extract_strided_slice %2 {offsets = [0, 0], sizes = [64, 8], strides = [1, 1]} : vector<64x128xf32> to vector<64x8xf32>
    %c0_3 = arith.constant 0 : index
    %c0_4 = arith.constant 0 : index
    %4 = vector.load %arg3[%c0_3, %c0_4] : memref<1x8xf32, #tpu.memory_space<vmem>>, vector<1x8xf32>
    %5 = vector.broadcast %4 : vector<1x8xf32> to vector<64x8xf32>
    %6 = arith.addf %3, %5 : vector<64x8xf32>
    %c0_5 = arith.constant 0 : index
    %c0_6 = arith.constant 0 : index
    %7 = vector.load %arg4[%c0_5, %c0_6] : memref<64x8xf32, #tpu.memory_space<vmem>>, vector<64x8xf32>
    tpu.vector_store %arg4[%c0_5, %c0_6], %6 {strides = array<i32>} : memref<64x8xf32, #tpu.memory_space<vmem>>, vector<64x8xf32>,
    return
  }
  func.func @transform_0(%arg0: i32) -> (i32, i32) {
    %c0_i32 = arith.constant 0 : i32
    %c0_i32_0 = arith.constant 0 : i32
    return %arg0, %c0_i32 : i32, i32
  }
  func.func @transform_1(%arg0: i32) -> (i32, i32) {
    %c0_i32 = arith.constant 0 : i32
    %c0_i32_0 = arith.constant 0 : i32
    %c0_i32_1 = arith.constant 0 : i32
    return %c0_i32, %c0_i32_0 : i32, i32
  }
  func.func @transform_2(%arg0: i32) -> (i32, i32) {
    %c0_i32 = arith.constant 0 : i32
    %c0_i32_0 = arith.constant 0 : i32
    %c0_i32_1 = arith.constant 0 : i32
    return %c0_i32, %c0_i32_0 : i32, i32
  }
  func.func @transform_3(%arg0: i32) -> (i32, i32) {
    %c0_i32 = arith.constant 0 : i32
    %c0_i32_0 = arith.constant 0 : i32
    return %arg0, %c0_i32 : i32, i32
  }
}

module attributes {stable_mosaic.version = 11 : i64} {
  func.func @kernel(%arg0: i32, %arg1: memref<64x128xbf16, #tpu.memory_space<vmem>>, %arg2: memref<128x128xbf16, #tpu.memory_space<vmem>>, %arg3: memref<64x8xf32, #tpu.memory_space<vmem>>, %arg4: memref<1x2x8xf32, #tpu.memory_space<vmem>>) attributes {dimension_semantics = [#tpu.dimension_semantics<parallel>], iteration_bounds = array<i64: 2>, scalar_prefetch = 0 : i64, scratch_operands = 0 : i64, tpu.core_type = #tpu.core_type<tc>, window_params = [{transform_indices = @transform_0, window_bounds = array<i64: 64, 128>}, {pipeline_mode = #tpu.pipeline_mode<synchronous>, transform_indices = @transform_1, window_bounds = array<i64: 128, 128>}, {transform_indices = @transform_2, window_bounds = array<i64: 64, 8>}, {transform_indices = @transform_3, window_bounds = array<i64: 1, 2, 8>}]} {
    %c0 = arith.constant 0 : index
    %c0_0 = arith.constant 0 : index
    %0 = vector.load %arg1[%c0, %c0_0] : memref<64x128xbf16, #tpu.memory_space<vmem>>, vector<64x128xbf16>
    %c0_1 = arith.constant 0 : index
    %c0_2 = arith.constant 0 : index
    %1 = vector.load %arg2[%c0_1, %c0_2] : memref<128x128xbf16, #tpu.memory_space<vmem>>, vector<128x128xbf16>
    %cst = arith.constant dense<0.000000e+00> : vector<64x128xf32>
    %2 = tpu.matmul %0, %1, %cst {dimension_numbers = #tpu.dot_dimension_numbers<[1], [0], [0], [1], [0, 0, 1, 1], [], []>} : vector<64x128xbf16>, vector<128x128xbf16>, vector<64x128xf32> -> vector<64x128xf32>
    %3 = vector.extract_strided_slice %2 {offsets = [0, 0], sizes = [64, 8], strides = [1, 1]} : vector<64x128xf32> to vector<64x8xf32>
    %c0_3 = arith.constant 0 : index
    %c0_4 = arith.constant 0 : index
    %4 = vector.load %arg3[%c0_3, %c0_4] : memref<64x8xf32, #tpu.memory_space<vmem>>, vector<64x8xf32>
    tpu.vector_store %arg3[%c0_3, %c0_4], %3 {strides = array<i32>} : memref<64x8xf32, #tpu.memory_space<vmem>>, vector<64x8xf32>,
    %cst_5 = arith.constant dense<0.000000e+00> : vector<8xf32>
    %5 = vector.multi_reduction <add>, %3, %cst_5 [0] : vector<64x8xf32> to vector<8xf32>
    %6 = vector.shape_cast %5 : vector<8xf32> to vector<1x8xf32>
    %cst_6 = arith.constant 1.562500e-02 : f32
    %7 = vector.broadcast %cst_6 : f32 to vector<1x8xf32>
    %8 = arith.mulf %6, %7 : vector<1x8xf32>
    %9 = vector.broadcast %8 : vector<1x8xf32> to vector<64x8xf32>
    %10 = arith.subf %3, %9 : vector<64x8xf32>
    %11 = arith.mulf %10, %10 : vector<64x8xf32>
    %cst_7 = arith.constant dense<0.000000e+00> : vector<8xf32>
    %12 = vector.multi_reduction <add>, %11, %cst_7 [0] : vector<64x8xf32> to vector<8xf32>
    %13 = vector.shape_cast %12 : vector<8xf32> to vector<1x8xf32>
    %14 = tpu.concatenate %6, %13 in 0 : vector<1x8xf32>, vector<1x8xf32> -> vector<2x8xf32>
    %15 = vector.shape_cast %14 : vector<2x8xf32> to vector<1x2x8xf32>
    %c0_8 = arith.constant 0 : index
    %c0_9 = arith.constant 0 : index
    %c0_10 = arith.constant 0 : index
    %16 = vector.load %arg4[%c0_8, %c0_9, %c0_10] : memref<1x2x8xf32, #tpu.memory_space<vmem>>, vector<1x2x8xf32>
    tpu.vector_store %arg4[%c0_8, %c0_9, %c0_10], %15 {strides = array<i32>} : memref<1x2x8xf32, #tpu.memory_space<vmem>>, vector<1x2x8xf32>,
    return
  }
  func.func @transform_0(%arg0: i32) -> (i32, i32) {
    %c0_i32 = arith.constant 0 : i32
    %c0_i32_0 = arith.constant 0 : i32
    return %arg0, %c0_i32 : i32, i32
  }
  func.func @transform_1(%arg0: i32) -> (i32, i32) {
    %c0_i32 = arith.constant 0 : i32
    %c0_i32_0 = arith.constant 0 : i32
    %c0_i32_1 = arith.constant 0 : i32
    return %c0_i32, %c0_i32_0 : i32, i32
  }
  func.func @transform_2(%arg0: i32) -> (i32, i32) {
    %c0_i32 = arith.constant 0 : i32
    %c0_i32_0 = arith.constant 0 : i32
    return %arg0, %c0_i32 : i32, i32
  }
  func.func @transform_3(%arg0: i32) -> (i32, i32, i32) {
    %c0_i32 = arith.constant 0 : i32
    %c0_i32_0 = arith.constant 0 : i32
    %c0_i32_1 = arith.constant 0 : i32
    return %arg0, %c0_i32, %c0_i32_0 : i32, i32, i32
  }
}

module attributes {stable_mosaic.version = 11 : i64} {
  func.func @kernel(%arg0: i32, %arg1: memref<64x8xf32, #tpu.memory_space<vmem>>, %arg2: memref<2x8xf32, #tpu.memory_space<vmem>>, %arg3: memref<64x8xf32, #tpu.memory_space<vmem>>) attributes {dimension_semantics = [#tpu.dimension_semantics<parallel>], iteration_bounds = array<i64: 2>, scalar_prefetch = 0 : i64, scratch_operands = 0 : i64, tpu.core_type = #tpu.core_type<tc>, window_params = [{transform_indices = @transform_0, window_bounds = array<i64: 64, 8>}, {pipeline_mode = #tpu.pipeline_mode<synchronous>, transform_indices = @transform_1, window_bounds = array<i64: 2, 8>}, {transform_indices = @transform_2, window_bounds = array<i64: 64, 8>}]} {
    %c0 = arith.constant 0 : index
    %c0_0 = arith.constant 0 : index
    %0 = vector.load %arg2[%c0, %c0_0] : memref<2x8xf32, #tpu.memory_space<vmem>>, vector<2x8xf32>
    %c0_1 = arith.constant 0 : index
    %c0_2 = arith.constant 0 : index
    %1 = vector.load %arg1[%c0_1, %c0_2] : memref<64x8xf32, #tpu.memory_space<vmem>>, vector<64x8xf32>
    %2 = vector.extract_strided_slice %0 {offsets = [0, 0], sizes = [1, 8], strides = [1, 1]} : vector<2x8xf32> to vector<1x8xf32>
    %3 = vector.broadcast %2 : vector<1x8xf32> to vector<64x8xf32>
    %4 = arith.mulf %1, %3 : vector<64x8xf32>
    %5 = vector.extract_strided_slice %0 {offsets = [1, 0], sizes = [1, 8], strides = [1, 1]} : vector<2x8xf32> to vector<1x8xf32>
    %6 = vector.broadcast %5 : vector<1x8xf32> to vector<64x8xf32>
    %7 = arith.addf %4, %6 : vector<64x8xf32>
    %cst = arith.constant 0.000000e+00 : f32
    %8 = vector.broadcast %cst : f32 to vector<64x8xf32>
    %9 = arith.maximumf %7, %8 : vector<64x8xf32>
    %c0_3 = arith.constant 0 : index
    %c0_4 = arith.constant 0 : index
    %10 = vector.load %arg3[%c0_3, %c0_4] : memref<64x8xf32, #tpu.memory_space<vmem>>, vector<64x8xf32>
    tpu.vector_store %arg3[%c0_3, %c0_4], %9 {strides = array<i32>} : memref<64x8xf32, #tpu.memory_space<vmem>>, vector<64x8xf32>,
    return
  }
  func.func @transform_0(%arg0: i32) -> (i32, i32) {
    %c0_i32 = arith.constant 0 : i32
    %c0_i32_0 = arith.constant 0 : i32
    return %arg0, %c0_i32 : i32, i32
  }
  func.func @transform_1(%arg0: i32) -> (i32, i32) {
    %c0_i32 = arith.constant 0 : i32
    %c0_i32_0 = arith.constant 0 : i32
    %c0_i32_1 = arith.constant 0 : i32
    return %c0_i32, %c0_i32_0 : i32, i32
  }
  func.func @transform_2(%arg0: i32) -> (i32, i32) {
    %c0_i32 = arith.constant 0 : i32
    %c0_i32_0 = arith.constant 0 : i32
    return %arg0, %c0_i32 : i32, i32
  }
}

module attributes {stable_mosaic.version = 11 : i64} {
  func.func @kernel(%arg0: i32, %arg1: memref<64x8xf32, #tpu.memory_space<vmem>>, %arg2: memref<2x8xf32, #tpu.memory_space<vmem>>, %arg3: memref<64x8xf32, #tpu.memory_space<vmem>>, %arg4: memref<64x8xf32, #tpu.memory_space<vmem>>) attributes {dimension_semantics = [#tpu.dimension_semantics<parallel>], iteration_bounds = array<i64: 2>, scalar_prefetch = 0 : i64, scratch_operands = 0 : i64, tpu.core_type = #tpu.core_type<tc>, window_params = [{transform_indices = @transform_0, window_bounds = array<i64: 64, 8>}, {pipeline_mode = #tpu.pipeline_mode<synchronous>, transform_indices = @transform_1, window_bounds = array<i64: 2, 8>}, {transform_indices = @transform_2, window_bounds = array<i64: 64, 8>}, {transform_indices = @transform_3, window_bounds = array<i64: 64, 8>}]} {
    %c0 = arith.constant 0 : index
    %c0_0 = arith.constant 0 : index
    %0 = vector.load %arg2[%c0, %c0_0] : memref<2x8xf32, #tpu.memory_space<vmem>>, vector<2x8xf32>
    %c0_1 = arith.constant 0 : index
    %c0_2 = arith.constant 0 : index
    %1 = vector.load %arg1[%c0_1, %c0_2] : memref<64x8xf32, #tpu.memory_space<vmem>>, vector<64x8xf32>
    %2 = vector.extract_strided_slice %0 {offsets = [0, 0], sizes = [1, 8], strides = [1, 1]} : vector<2x8xf32> to vector<1x8xf32>
    %3 = vector.broadcast %2 : vector<1x8xf32> to vector<64x8xf32>
    %4 = arith.mulf %1, %3 : vector<64x8xf32>
    %5 = vector.extract_strided_slice %0 {offsets = [1, 0], sizes = [1, 8], strides = [1, 1]} : vector<2x8xf32> to vector<1x8xf32>
    %6 = vector.broadcast %5 : vector<1x8xf32> to vector<64x8xf32>
    %7 = arith.addf %4, %6 : vector<64x8xf32>
    %c0_3 = arith.constant 0 : index
    %c0_4 = arith.constant 0 : index
    %8 = vector.load %arg3[%c0_3, %c0_4] : memref<64x8xf32, #tpu.memory_space<vmem>>, vector<64x8xf32>
    %9 = arith.addf %7, %8 : vector<64x8xf32>
    %cst = arith.constant 0.000000e+00 : f32
    %10 = vector.broadcast %cst : f32 to vector<64x8xf32>
    %11 = arith.maximumf %9, %10 : vector<64x8xf32>
    %c0_5 = arith.constant 0 : index
    %c0_6 = arith.constant 0 : index
    %12 = vector.load %arg4[%c0_5, %c0_6] : memref<64x8xf32, #tpu.memory_space<vmem>>, vector<64x8xf32>
    tpu.vector_store %arg4[%c0_5, %c0_6], %11 {strides = array<i32>} : memref<64x8xf32, #tpu.memory_space<vmem>>, vector<64x8xf32>,
    return
  }
  func.func @transform_0(%arg0: i32) -> (i32, i32) {
    %c0_i32 = arith.constant 0 : i32
    %c0_i32_0 = arith.constant 0 : i32
    return %arg0, %c0_i32 : i32, i32
  }
  func.func @transform_1(%arg0: i32) -> (i32, i32) {
    %c0_i32 = arith.constant 0 : i32
    %c0_i32_0 = arith.constant 0 : i32
    %c0_i32_1 = arith.constant 0 : i32
    return %c0_i32, %c0_i32_0 : i32, i32
  }
  func.func @transform_2(%arg0: i32) -> (i32, i32) {
    %c0_i32 = arith.constant 0 : i32
    %c0_i32_0 = arith.constant 0 : i32
    return %arg0, %c0_i32 : i32, i32
  }
  func.func @transform_3(%arg0: i32) -> (i32, i32) {
    %c0_i32 = arith.constant 0 : i32
    %c0_i32_0 = arith.constant 0 : i32
    return %arg0, %c0_i32 : i32, i32
  }
}

</mosaic_0001>

<llo_original>
// kernel: tpu_custom_call.1
$region0: #{tpu_custom_call.1}
  #allocation0 [shape = 'u32[]', space=smem, size = 0x4, offset = 0x4, fixed_abs, tag = 'smem constant byte address 0x4 - core index']
  #allocation1 [shape = 'u32[72,128]{1,0:T(1,128)}', space=vmem, size = 0x9000, scoped, tag = 'internal scratch']
  %s0 = inlined_call_operand.hbm [shape: f32[8,128], index: 0, kind: input, shape index: {}]
  %s1 = inlined_call_operand.hbm [shape: f32[16,128], index: 1, kind: output, shape index: {}]
  %s2 = sld [smem:[#allocation0]]
  $region41: #{tpu_custom_call.1} parent=0
    _
  %s4 = ssub.s32 1, %s2
  %s5 = scalar_select 0, %s4, %s2
  $region1: #{tpu_custom_call.1} parent=0
    #allocation2 [shape = 'u8[4096]{0}', space=vmem, size = 0x1000, scoped, tag = 'input window, operand 0, single buffered']
    #allocation3 [shape = 's32[2]{0}', space=sflag, size = 0x8, scoped, tag = 'scoped memory for tpu_custom_call.1']
    #allocation4 [shape = 's32[2]{0}', space=sflag, size = 0x8, scoped, tag = 'scoped memory for tpu_custom_call.1']
    #allocation5 [shape = 'u8[8192]{0}', space=vmem, size = 0x2000, scoped, tag = 'output window, operand 0']
    %6 = vsyncpa [#allocation3], 0
    %7 = vsyncpa [#allocation4], 0
    %s8 = scalar_lea.sflag [#allocation4], 1
    %9 = vsyncpa %s8, 0
    loop: start=0, step=1, limit=4
    $region2: #{tpu_custom_call.1} parent=1 // loop_pre_header
      _
    $region3: #{tpu_custom_call.1} parent=1 // loop_header
      %s11 = sphi 0, %s15
      %p12 = scmp.ge.s32.totalorder %s11, 4
      %s19 = sphi 0, %s19
      %s21 = sphi 0, %s19
      %s22 = sphi 0, %s21
      %s36 = sphi 0, %s22
      %s42 = sphi 0, %s44
      %s45 = sphi 0, %s42
      %s46 = sphi 0, %s45
      %s62 = sphi 0, %s46
    $region4: #{tpu_custom_call.1} parent=1 // loop_header_branch
      %14 = sbr.rel (%p12) target = $region8
    $region5: #{tpu_custom_call.1} parent=1 // loop_body
      %s16 = ssub.s32 %s11, 1
      %s17 = ssub.s32 %s11, 2
      %s18 = sadd.s32 %s11, 1
      %s20 = sadd.s32 %s19, 1
      %p23 = scmp.eq.s32.totalorder %s11, 1
      %p24 = scmp.ne.s32.totalorder %s19, %s21
      %p25 = scmp.eq.s32.totalorder %s11, 0
      %p26 = por %p24, %p25
      %p27 = scmp.ne.s32.totalorder %s19, %s21
      %p28 = scmp.eq.s32.totalorder %s16, 1
      %p29 = por %p27, %p28
      %p30 = scmp.ne.s32.totalorder %s21, %s22
      %p31 = scmp.eq.s32.totalorder %s16, 0
      %p32 = por %p30, %p31
      %p33 = scmp.ne.s32.totalorder %s21, %s22
      %p34 = scmp.eq.s32.totalorder %s17, 1
      %p35 = por %p33, %p34
      %p37 = scmp.ne.s32.totalorder %s22, %s36
      %p38 = scmp.eq.s32.totalorder %s17, 0
      %p39 = por %p37, %p38
      %s40 = ssub.s32 %s11, %s18
      %p41 = scmp.eq.s32.totalorder %s40, 0
      %s43 = sadd.s32 %s42, 1
      %s44 = scalar_select %p41, %s42, %s43
      %p47 = pneg %p41
      %p48 = scmp.eq.s32.totalorder %s11, 1
      %p49 = por %p47, %p48
      %p50 = scmp.ne.s32.totalorder %s42, %s45
      %p51 = scmp.eq.s32.totalorder %s11, 0
      %p52 = por %p50, %p51
      %p53 = scmp.ne.s32.totalorder %s42, %s45
      %p54 = scmp.eq.s32.totalorder %s16, 1
      %p55 = por %p53, %p54
      %p56 = scmp.ne.s32.totalorder %s45, %s46
      %p57 = scmp.eq.s32.totalorder %s16, 0
      %p58 = por %p56, %p57
      %p59 = scmp.ne.s32.totalorder %s45, %s46
      %p60 = scmp.eq.s32.totalorder %s17, 1
      %p61 = por %p59, %p60
      %p63 = scmp.ne.s32.totalorder %s46, %s62
      %p64 = scmp.eq.s32.totalorder %s17, 0
      %p65 = por %p63, %p64
      %p66 = scmp.le.s32.totalorder 1, %s11
      %p67 = scmp.lt.s32.totalorder %s11, 3
      %p68 = pnand %p66, %p67
      %p69 = pneg %p68
      // Predicated region
      $region9: #{tpu_custom_call.1} parent=5 // pred_check
        _
      $region10: #{tpu_custom_call.1} parent=5 // pred_check_branch
        %71 = sbr.rel (%p68) target = $region12
      $region11: #{tpu_custom_call.1} parent=5 // pred_region
        %s72 = ssub.s32 %s11, 1
        // Predicated region
        $region13: #{tpu_custom_call.1} parent=11 // pred_check
          %p73 = pneg %p32
        $region14: #{tpu_custom_call.1} parent=11 // pred_check_branch
          %75 = sbr.rel (%p73) target = $region16
        $region15: #{tpu_custom_call.1} parent=11 // pred_region
          %77 = vsyncadd [#allocation3], 0
          %s79 = sshll.u32 %s0, 4
          %s80 = int_to_ptr.hbm [resolvable:$true] %s79
          %s81 = sshll.u32 [#allocation2], 4
          %s82 = int_to_ptr.vmem [resolvable:$true] %s81
          %84 = dma.hbm_to_vmem [thread:$0]  %s80, 128, %s82, [#allocation3]
        $region16: #{tpu_custom_call.1} parent=11 // pred_fallthru
          _
      $region12: #{tpu_custom_call.1} parent=5 // pred_fallthru
        _
      %p85 = scmp.lt.s32.totalorder %s11, 2
      // Predicated region
      $region17: #{tpu_custom_call.1} parent=5 // pred_check
        %p86 = pneg %p85
      $region18: #{tpu_custom_call.1} parent=5 // pred_check_branch
        %88 = sbr.rel (%p86) target = $region20
      $region19: #{tpu_custom_call.1} parent=5 // pred_region
        _
      $region20: #{tpu_custom_call.1} parent=5 // pred_fallthru
        _
      %p89 = scmp.le.s32.totalorder 1, %s11
      %p90 = scmp.lt.s32.totalorder %s11, 3
      %p91 = pnand %p89, %p90
      %p92 = pneg %p91
      // Predicated region
      $region21: #{tpu_custom_call.1} parent=5 // pred_check
        _
      $region22: #{tpu_custom_call.1} parent=5 // pred_check_branch
        %94 = sbr.rel (%p91) target = $region24
      $region23: #{tpu_custom_call.1} parent=5 // pred_region
        %s95 = ssub.s32 %s11, 1
        // Predicated region
        $region25: #{tpu_custom_call.1} parent=23 // pred_check
          %p96 = pneg %p32
        $region26: #{tpu_custom_call.1} parent=23 // pred_check_branch
          %98 = sbr.rel (%p96) target = $region28
        $region27: #{tpu_custom_call.1} parent=23 // pred_region
          %100 = dma.done [#allocation3], 128
        $region28: #{tpu_custom_call.1} parent=23 // pred_fallthru
          _
        %p101 = pneg %p32
        %p102 = pneg %p29
        %p103 = pneg %p58
        %p104 = pneg %p55
        %s105 = sand.u32 %s45, 1
        %s106 = scalar_lea.sflag [#allocation4], %s105
        %s107 = sand.u32 %s45, 1
        %s108 = smul.addr %s107, 8
        %s109 = scalar_lea.vmem [#allocation5], %s108
        %v110 = vld [vmem:[#allocation2] sm:$0xff]
        %111 = vst [vmem:[%s109] sm:$0xff] %v110
        %s112 = sand.u32 %s45, 1
        %s113 = scalar_lea.sflag [#allocation4], %s112
        %s114 = sand.u32 %s45, 1
        %s115 = smul.addr %s114, 8
        %s116 = scalar_lea.vmem [#allocation5], %s115
        // Predicated region
        $region29: #{tpu_custom_call.1} parent=23 // pred_check
          %p117 = pneg %p55
        $region30: #{tpu_custom_call.1} parent=23 // pred_check_branch
          %119 = sbr.rel (%p117) target = $region32
        $region31: #{tpu_custom_call.1} parent=23 // pred_region
          %121 = vsyncadd %s113, 0
          %s122 = smul.addr %s16, 8
          %s123 = scalar_lea.hbm %s1, %s122
          %s125 = sshll.u32 %s116, 4
          %s126 = int_to_ptr.vmem [resolvable:$true] %s125
          %s127 = sshll.u32 %s123, 4
          %s128 = int_to_ptr.hbm [resolvable:$true] %s127
          %130 = dma.vmem_to_hbm [thread:$0]  %s126, 128, %s128, %s113
        $region32: #{tpu_custom_call.1} parent=23 // pred_fallthru
          _
      $region24: #{tpu_custom_call.1} parent=5 // pred_fallthru
        _
      %p131 = scmp.le.s32.totalorder 2, %s11
      // Predicated region
      $region33: #{tpu_custom_call.1} parent=5 // pred_check
        %p132 = pneg %p131
      $region34: #{tpu_custom_call.1} parent=5 // pred_check_branch
        %134 = sbr.rel (%p132) target = $region36
      $region35: #{tpu_custom_call.1} parent=5 // pred_region
        %s135 = ssub.s32 %s11, 2
        // Predicated region
        $region37: #{tpu_custom_call.1} parent=35 // pred_check
          %p136 = pneg %p61
        $region38: #{tpu_custom_call.1} parent=35 // pred_check_branch
          %138 = sbr.rel (%p136) target = $region40
        $region39: #{tpu_custom_call.1} parent=35 // pred_region
          %s139 = sand.u32 %s46, 1
          %s140 = scalar_lea.sflag [#allocation4], %s139
          %s141 = sand.u32 %s46, 1
          %s142 = smul.addr %s141, 8
          %s143 = scalar_lea.vmem [#allocation5], %s142
          %145 = dma.done %s140, 128
        $region40: #{tpu_custom_call.1} parent=35 // pred_fallthru
          _
      $region36: #{tpu_custom_call.1} parent=5 // pred_fallthru
        _
    $region6: #{tpu_custom_call.1} parent=1 // loop_footer
      %s15 = sadd.s32 1, %s11
    $region7: #{tpu_custom_call.1} parent=1 // loop_footer_branch
      %10 = sbr.rel target = $region3
    $region8: #{tpu_custom_call.1} parent=1 // loop_exit
      _
    %146 = vsyncpa [#allocation3], 1
    %s147 = scalar_lea.sflag [#allocation3], 1
    %148 = vsyncpa %s147, 1
    %149 = vsyncpa [#allocation4], 1
    %s150 = scalar_lea.sflag [#allocation4], 1
    %151 = vsyncpa %s150, 1

// kernel: res_sect_forward.9
$region0: #{res_sect_forward.9}
  #allocation0 [shape = 'u32[]', space=smem, size = 0x4, offset = 0x4, fixed_abs, tag = 'smem constant byte address 0x4 - core index']
  #allocation1 [shape = 'u32[72,128]{1,0:T(1,128)}', space=vmem, size = 0x9000, scoped, tag = 'internal scratch']
  %s0 = inlined_call_operand.vmem [shape: bf16[128,128], index: 0, kind: input, shape index: {}]
  %s1 = inlined_call_operand.vmem [shape: bf16[128,128], index: 1, kind: input, shape index: {}]
  %s2 = inlined_call_operand.vmem [shape: f32[1,8], index: 2, kind: input, shape index: {}]
  %s3 = inlined_call_operand.vmem [shape: f32[128,8], index: 3, kind: output, shape index: {}]
  %s4 = sld [smem:[#allocation0]]
  $region45: #{res_sect_forward.9} parent=0
    _
  %s6 = ssub.s32 1, %s4
  %s7 = scalar_select 0, %s6, %s4
  loop: start=0, step=1, limit=4
  $region2: #{res_sect_forward.9} parent=0 // loop_pre_header
    _
  $region3: #{res_sect_forward.9} parent=0 // loop_header
    %s9 = sphi 0, %s13
    %p10 = scmp.ge.s32.totalorder %s9, 4
    %s19 = sphi 0, %s21
    %s22 = sphi 0, %s19
    %s23 = sphi 0, %s22
    %s39 = sphi 0, %s23
    %s43 = sphi 0, %s43
    %s45 = sphi 0, %s43
    %s46 = sphi 0, %s45
    %s60 = sphi 0, %s46
    %s64 = sphi 0, %s64
    %s66 = sphi 0, %s64
    %s67 = sphi 0, %s66
    %s81 = sphi 0, %s67
    %s87 = sphi 0, %s89
    %s90 = sphi 0, %s87
    %s91 = sphi 0, %s90
    %s107 = sphi 0, %s91
  $region4: #{res_sect_forward.9} parent=0 // loop_header_branch
    %12 = sbr.rel (%p10) target = $region8
  $region5: #{res_sect_forward.9} parent=0 // loop_body
    %s14 = ssub.s32 %s9, 1
    %s15 = ssub.s32 %s9, 2
    %s16 = sadd.s32 %s9, 1
    %s17 = ssub.s32 %s9, %s16
    %p18 = scmp.eq.s32.totalorder %s17, 0
    %s20 = sadd.s32 %s19, 1
    %s21 = scalar_select %p18, %s19, %s20
    %p24 = pneg %p18
    %p25 = scmp.eq.s32.totalorder %s9, 1
    %p26 = por %p24, %p25
    %p27 = scmp.ne.s32.totalorder %s19, %s22
    %p28 = scmp.eq.s32.totalorder %s9, 0
    %p29 = por %p27, %p28
    %p30 = scmp.ne.s32.totalorder %s19, %s22
    %p31 = scmp.eq.s32.totalorder %s14, 1
    %p32 = por %p30, %p31
    %p33 = scmp.ne.s32.totalorder %s22, %s23
    %p34 = scmp.eq.s32.totalorder %s14, 0
    %p35 = por %p33, %p34
    %p36 = scmp.ne.s32.totalorder %s22, %s23
    %p37 = scmp.eq.s32.totalorder %s15, 1
    %p38 = por %p36, %p37
    %p40 = scmp.ne.s32.totalorder %s23, %s39
    %p41 = scmp.eq.s32.totalorder %s15, 0
    %p42 = por %p40, %p41
    %s44 = sadd.s32 %s43, 1
    %p47 = scmp.eq.s32.totalorder %s9, 1
    %p48 = scmp.ne.s32.totalorder %s43, %s45
    %p49 = scmp.eq.s32.totalorder %s9, 0
    %p50 = por %p48, %p49
    %p51 = scmp.ne.s32.totalorder %s43, %s45
    %p52 = scmp.eq.s32.totalorder %s14, 1
    %p53 = por %p51, %p52
    %p54 = scmp.ne.s32.totalorder %s45, %s46
    %p55 = scmp.eq.s32.totalorder %s14, 0
    %p56 = por %p54, %p55
    %p57 = scmp.ne.s32.totalorder %s45, %s46
    %p58 = scmp.eq.s32.totalorder %s15, 1
    %p59 = por %p57, %p58
    %p61 = scmp.ne.s32.totalorder %s46, %s60
    %p62 = scmp.eq.s32.totalorder %s15, 0
    %p63 = por %p61, %p62
    %s65 = sadd.s32 %s64, 1
    %p68 = scmp.eq.s32.totalorder %s9, 1
    %p69 = scmp.ne.s32.totalorder %s64, %s66
    %p70 = scmp.eq.s32.totalorder %s9, 0
    %p71 = por %p69, %p70
    %p72 = scmp.ne.s32.totalorder %s64, %s66
    %p73 = scmp.eq.s32.totalorder %s14, 1
    %p74 = por %p72, %p73
    %p75 = scmp.ne.s32.totalorder %s66, %s67
    %p76 = scmp.eq.s32.totalorder %s14, 0
    %p77 = por %p75, %p76
    %p78 = scmp.ne.s32.totalorder %s66, %s67
    %p79 = scmp.eq.s32.totalorder %s15, 1
    %p80 = por %p78, %p79
    %p82 = scmp.ne.s32.totalorder %s67, %s81
    %p83 = scmp.eq.s32.totalorder %s15, 0
    %p84 = por %p82, %p83
    %s85 = ssub.s32 %s9, %s16
    %p86 = scmp.eq.s32.totalorder %s85, 0
    %s88 = sadd.s32 %s87, 1
    %s89 = scalar_select %p86, %s87, %s88
    %p92 = pneg %p86
    %p93 = scmp.eq.s32.totalorder %s9, 1
    %p94 = por %p92, %p93
    %p95 = scmp.ne.s32.totalorder %s87, %s90
    %p96 = scmp.eq.s32.totalorder %s9, 0
    %p97 = por %p95, %p96
    %p98 = scmp.ne.s32.totalorder %s87, %s90
    %p99 = scmp.eq.s32.totalorder %s14, 1
    %p100 = por %p98, %p99
    %p101 = scmp.ne.s32.totalorder %s90, %s91
    %p102 = scmp.eq.s32.totalorder %s14, 0
    %p103 = por %p101, %p102
    %p104 = scmp.ne.s32.totalorder %s90, %s91
    %p105 = scmp.eq.s32.totalorder %s15, 1
    %p106 = por %p104, %p105
    %p108 = scmp.ne.s32.totalorder %s91, %s107
    %p109 = scmp.eq.s32.totalorder %s15, 0
    %p110 = por %p108, %p109
    %p111 = scmp.le.s32.totalorder 1, %s9
    %p112 = scmp.lt.s32.totalorder %s9, 3
    %p113 = pnand %p111, %p112
    %p114 = pneg %p113
    // Predicated region
    $region9: #{res_sect_forward.9} parent=5 // pred_check
      _
    $region10: #{res_sect_forward.9} parent=5 // pred_check_branch
      %116 = sbr.rel (%p113) target = $region12
    $region11: #{res_sect_forward.9} parent=5 // pred_region
      %s117 = ssub.s32 %s9, 1
      // Predicated region
      $region13: #{res_sect_forward.9} parent=11 // pred_check
        %p118 = pneg %p56
      $region14: #{res_sect_forward.9} parent=11 // pred_check_branch
        %120 = sbr.rel (%p118) target = $region16
      $region15: #{res_sect_forward.9} parent=11 // pred_region
        _
      $region16: #{res_sect_forward.9} parent=11 // pred_fallthru
        _
      // Predicated region
      $region17: #{res_sect_forward.9} parent=11 // pred_check
        %p121 = pneg %p77
      $region18: #{res_sect_forward.9} parent=11 // pred_check_branch
        %123 = sbr.rel (%p121) target = $region20
      $region19: #{res_sect_forward.9} parent=11 // pred_region
        _
      $region20: #{res_sect_forward.9} parent=11 // pred_fallthru
        _
    $region12: #{res_sect_forward.9} parent=5 // pred_fallthru
      _
    %p124 = scmp.lt.s32.totalorder %s9, 2
    // Predicated region
    $region21: #{res_sect_forward.9} parent=5 // pred_check
      %p125 = pneg %p124
    $region22: #{res_sect_forward.9} parent=5 // pred_check_branch
      %127 = sbr.rel (%p125) target = $region24
    $region23: #{res_sect_forward.9} parent=5 // pred_region
      // Predicated region
      $region25: #{res_sect_forward.9} parent=23 // pred_check
        %p128 = pneg %p29
      $region26: #{res_sect_forward.9} parent=23 // pred_check_branch
        %130 = sbr.rel (%p128) target = $region28
      $region27: #{res_sect_forward.9} parent=23 // pred_region
        %s131 = smul.u32 8, %s9
        %p132 = scmp.lt.s32.totalorder %s131, 15
        %s133 = scalar_select %p132, %s131, 15
        %s134 = smul.addr %s133, 4
        %s135 = scalar_lea.vmem %s0, %s134
        %s136 = smul.u32 8, %s9
      $region28: #{res_sect_forward.9} parent=23 // pred_fallthru
        _
    $region24: #{res_sect_forward.9} parent=5 // pred_fallthru
      _
    %p137 = scmp.le.s32.totalorder 1, %s9
    %p138 = scmp.lt.s32.totalorder %s9, 3
    %p139 = pnand %p137, %p138
    %p140 = pneg %p139
    // Predicated region
    $region29: #{res_sect_forward.9} parent=5 // pred_check
      _
    $region30: #{res_sect_forward.9} parent=5 // pred_check_branch
      %142 = sbr.rel (%p139) target = $region32
    $region31: #{res_sect_forward.9} parent=5 // pred_region
      %s143 = ssub.s32 %s9, 1
      %s144 = smul.u32 8, %s14
      %p145 = scmp.lt.s32.totalorder %s144, 15
      %s146 = scalar_select %p145, %s144, 15
      %s147 = smul.addr %s146, 4
      %s148 = scalar_lea.vmem %s0, %s147
      %p149 = pneg %p35
      %p150 = pneg %p32
      %p151 = pneg %p56
      %p152 = pneg %p53
      %p153 = pneg %p77
      %p154 = pneg %p74
      %p155 = pneg %p103
      %p156 = pneg %p100
      %s157 = smul.u32 8, %s14
      %p158 = scmp.lt.s32.totalorder %s157, 15
      %s159 = scalar_select %p158, %s157, 15
      %s160 = smul.addr %s159, 8
      %s161 = scalar_lea.vmem %s3, %s160
      %s162 = smul.u32 8, %s14
      %p163 = scmp.lt.s32.totalorder %s162, 15
      %s164 = scalar_select %p163, %s162, 15
      %s165 = smul.addr %s164, 4
      %s166 = scalar_lea.vmem %s0, %s165
      %s167 = smul.u32 8, %s14
      %s168 = smul.u32 8, %s14
      %p169 = scmp.lt.s32.totalorder %s168, 15
      %s170 = scalar_select %p169, %s168, 15
      %s171 = smul.addr %s170, 8
      %s172 = scalar_lea.vmem %s3, %s171
      %s173 = smul.u32 8, %s14
      %v174 = vld [vmem:[%s166] sm:$0xf]
      %v175 = vld [vmem:[%s166 + $0x4] sm:$0xf]
      %v176 = vld [vmem:[%s166 + $0x8] sm:$0xf]
      %v177 = vld [vmem:[%s166 + $0xc] sm:$0xf]
      %v178 = vld [vmem:[%s166 + $0x10] sm:$0xf]
      %v179 = vld [vmem:[%s166 + $0x14] sm:$0xf]
      %v180 = vld [vmem:[%s166 + $0x18] sm:$0xf]
      %v181 = vld [vmem:[%s166 + $0x1c] sm:$0xf]
      %v182 = vld [vmem:[%s1] sm:$0xf]
      %v183 = vld [vmem:[%s1 + $0x4] sm:$0xf]
      %v184 = vld [vmem:[%s1 + $0x8] sm:$0xf]
      %v185 = vld [vmem:[%s1 + $0xc] sm:$0xf]
      %v186 = vld [vmem:[%s1 + $0x10] sm:$0xf]
      %v187 = vld [vmem:[%s1 + $0x14] sm:$0xf]
      %v188 = vld [vmem:[%s1 + $0x18] sm:$0xf]
      %v189 = vld [vmem:[%s1 + $0x1c] sm:$0xf]
      %v190 = vld [vmem:[%s1 + $0x20] sm:$0xf]
      %v191 = vld [vmem:[%s1 + $0x24] sm:$0xf]
      %v192 = vld [vmem:[%s1 + $0x28] sm:$0xf]
      %v193 = vld [vmem:[%s1 + $0x2c] sm:$0xf]
      %v194 = vld [vmem:[%s1 + $0x30] sm:$0xf]
      %v195 = vld [vmem:[%s1 + $0x34] sm:$0xf]
      %v196 = vld [vmem:[%s1 + $0x38] sm:$0xf]
      %v197 = vld [vmem:[%s1 + $0x3c] sm:$0xf]
      %v206 = vunpack.c.l.b16 %v174
      %v207 = vunpack.c.l.b16 %v175
      %v208 = vunpack.c.l.b16 %v176
      %v209 = vunpack.c.l.b16 %v177
      %v210 = vunpack.c.l.b16 %v178
      %v211 = vunpack.c.l.b16 %v179
      %v212 = vunpack.c.l.b16 %v180
      %v213 = vunpack.c.l.b16 %v181
      %v214 = vpack.c.b16 %v207, %v206
      %v215 = vpack.c.b16 %v209, %v208
      %v216 = vpack.c.b16 %v211, %v210
      %v217 = vpack.c.b16 %v213, %v212
      %v238 = vunpack.c.l.b16 %v182
      %v239 = vunpack.c.l.b16 %v183
      %v240 = vunpack.c.l.b16 %v184
      %v241 = vunpack.c.l.b16 %v185
      %v242 = vunpack.c.l.b16 %v186
      %v243 = vunpack.c.l.b16 %v187
      %v244 = vunpack.c.l.b16 %v188
      %v245 = vunpack.c.l.b16 %v189
      %v246 = vunpack.c.l.b16 %v190
      %v247 = vunpack.c.l.b16 %v191
      %v248 = vunpack.c.l.b16 %v192
      %v249 = vunpack.c.l.b16 %v193
      %v250 = vunpack.c.l.b16 %v194
      %v251 = vunpack.c.l.b16 %v195
      %v252 = vunpack.c.l.b16 %v196
      %v253 = vunpack.c.l.b16 %v197
      %v254 = vpack.c.b16 %v239, %v238
      %v255 = vpack.c.b16 %v241, %v240
      %v256 = vpack.c.b16 %v243, %v242
      %v257 = vpack.c.b16 %v245, %v244
      %v258 = vpack.c.b16 %v247, %v246
      %v259 = vpack.c.b16 %v249, %v248
      %v260 = vpack.c.b16 %v251, %v250
      %v261 = vpack.c.b16 %v253, %v252
      %270 = vmatpush.bf16.msra.mxu0 %v261
      %271 = vmatpush.bf16.msra.mxu0 %v260
      %272 = vmatpush.bf16.msra.mxu0 %v259
      %273 = vmatpush.bf16.msra.mxu0 %v258
      %274 = vmatpush.bf16.msra.mxu0 %v257
      %275 = vmatpush.bf16.msra.mxu0 %v256
      %276 = vmatpush.bf16.msra.mxu0 %v255
      %277 = vmatpush.bf16.msra.mxu0 %v254
      %278 = vmatmul.bf16.gmra.mxu0 %v214
      %v279 = vpop.f32.mrf.mxu0
      %v280 = vadd.f32 0.0, %v279
      %v281 = vpop.f32.mrf.mxu0
      %v282 = vadd.f32 0.0, %v281
      %283 = vmatmul.bf16.gmra.mxu0 %v215
      %v284 = vpop.f32.mrf.mxu0
      %v285 = vadd.f32 0.0, %v284
      %v286 = vpop.f32.mrf.mxu0
      %v287 = vadd.f32 0.0, %v286
      %288 = vmatmul.bf16.gmra.mxu0 %v216
      %v289 = vpop.f32.mrf.mxu0
      %v290 = vadd.f32 0.0, %v289
      %v291 = vpop.f32.mrf.mxu0
      %v292 = vadd.f32 0.0, %v291
      %293 = vmatmul.bf16.gmra.mxu0 %v217
      %v294 = vpop.f32.mrf.mxu0
      %v295 = vadd.f32 0.0, %v294
      %v296 = vpop.f32.mrf.mxu0
      %v297 = vadd.f32 0.0, %v296
      %298 = vdwg.mxu0
      %v299 = vld [vmem:[%s2] sm:$0x1]
      %v301 = vperm.slane %v299, 0
      %v303 = vadd.f32 %v280, %v301
      %v304 = vadd.f32 %v282, %v301
      %v305 = vadd.f32 %v285, %v301
      %v306 = vadd.f32 %v287, %v301
      %v307 = vadd.f32 %v290, %v301
      %v308 = vadd.f32 %v292, %v301
      %v309 = vadd.f32 %v295, %v301
      %v310 = vadd.f32 %v297, %v301
      %vm311 = vcmask 64512
      %312 = vst.msk [vmem:[%s172] sm:$0xff] %vm311, %v303
      %313 = vst.msk [vmem:[%s172 + $0x8] sm:$0xff] %vm311, %v304
      %314 = vst.msk [vmem:[%s172 + $0x10] sm:$0xff] %vm311, %v305
      %315 = vst.msk [vmem:[%s172 + $0x18] sm:$0xff] %vm311, %v306
      %316 = vst.msk [vmem:[%s172 + $0x20] sm:$0xff] %vm311, %v307
      %317 = vst.msk [vmem:[%s172 + $0x28] sm:$0xff] %vm311, %v308
      %318 = vst.msk [vmem:[%s172 + $0x30] sm:$0xff] %vm311, %v309
      %319 = vst.msk [vmem:[%s172 + $0x38] sm:$0xff] %vm311, %v310
      %s320 = smul.u32 8, %s14
      %p321 = scmp.lt.s32.totalorder %s320, 15
      %s322 = scalar_select %p321, %s320, 15
      %s323 = smul.addr %s322, 8
      %s324 = scalar_lea.vmem %s3, %s323
      // Predicated region
      $region33: #{res_sect_forward.9} parent=31 // pred_check
        %p325 = pneg %p100
      $region34: #{res_sect_forward.9} parent=31 // pred_check_branch
        %327 = sbr.rel (%p325) target = $region36
      $region35: #{res_sect_forward.9} parent=31 // pred_region
        %s328 = smul.u32 8, %s14
      $region36: #{res_sect_forward.9} parent=31 // pred_fallthru
        _
    $region32: #{res_sect_forward.9} parent=5 // pred_fallthru
      _
    %p329 = scmp.le.s32.totalorder 2, %s9
    // Predicated region
    $region37: #{res_sect_forward.9} parent=5 // pred_check
      %p330 = pneg %p329
    $region38: #{res_sect_forward.9} parent=5 // pred_check_branch
      %332 = sbr.rel (%p330) target = $region40
    $region39: #{res_sect_forward.9} parent=5 // pred_region
      %s333 = ssub.s32 %s9, 2
      // Predicated region
      $region41: #{res_sect_forward.9} parent=39 // pred_check
        %p334 = pneg %p106
      $region42: #{res_sect_forward.9} parent=39 // pred_check_branch
        %336 = sbr.rel (%p334) target = $region44
      $region43: #{res_sect_forward.9} parent=39 // pred_region
        %s337 = smul.u32 8, %s15
        %p338 = scmp.lt.s32.totalorder %s337, 15
        %s339 = scalar_select %p338, %s337, 15
        %s340 = smul.addr %s339, 8
        %s341 = scalar_lea.vmem %s3, %s340
      $region44: #{res_sect_forward.9} parent=39 // pred_fallthru
        _
    $region40: #{res_sect_forward.9} parent=5 // pred_fallthru
      _
  $region6: #{res_sect_forward.9} parent=0 // loop_footer
    %s13 = sadd.s32 1, %s9
  $region7: #{res_sect_forward.9} parent=0 // loop_footer_branch
    %8 = sbr.rel target = $region3
  $region8: #{res_sect_forward.9} parent=0 // loop_exit
    _

// kernel: res_sect_forward.10
$region0: #{res_sect_forward.10}
  #allocation0 [shape = 'u32[]', space=smem, size = 0x4, offset = 0x4, fixed_abs, tag = 'smem constant byte address 0x4 - core index']
  #allocation1 [shape = 'u32[72,128]{1,0:T(1,128)}', space=vmem, size = 0x9000, scoped, tag = 'internal scratch']
  %s0 = inlined_call_operand.vmem [shape: bf16[128,128], index: 0, kind: input, shape index: {}]
  %s1 = inlined_call_operand.vmem [shape: bf16[128,128], index: 1, kind: input, shape index: {}]
  %s2 = inlined_call_operand.vmem [shape: f32[128,8], index: 2, kind: output, shape index: {0}]
  %s3 = inlined_call_operand.vmem [shape: f32[2,2,8], index: 3, kind: output, shape index: {1}]
  %4 = xla_tuple %s2, %s3
  %s5 = sld [smem:[#allocation0]]
  $region49: #{res_sect_forward.10} parent=0
    _
  %s7 = ssub.s32 1, %s5
  %s8 = scalar_select 0, %s7, %s5
  loop: start=0, step=1, limit=4
  $region2: #{res_sect_forward.10} parent=0 // loop_pre_header
    _
  $region3: #{res_sect_forward.10} parent=0 // loop_header
    %s10 = sphi 0, %s14
    %p11 = scmp.ge.s32.totalorder %s10, 4
    %s20 = sphi 0, %s22
    %s23 = sphi 0, %s20
    %s24 = sphi 0, %s23
    %s40 = sphi 0, %s24
    %s44 = sphi 0, %s44
    %s46 = sphi 0, %s44
    %s47 = sphi 0, %s46
    %s61 = sphi 0, %s47
    %s67 = sphi 0, %s69
    %s70 = sphi 0, %s67
    %s71 = sphi 0, %s70
    %s87 = sphi 0, %s71
    %s93 = sphi 0, %s95
    %s96 = sphi 0, %s93
    %s97 = sphi 0, %s96
    %s113 = sphi 0, %s97
  $region4: #{res_sect_forward.10} parent=0 // loop_header_branch
    %13 = sbr.rel (%p11) target = $region8
  $region5: #{res_sect_forward.10} parent=0 // loop_body
    %s15 = ssub.s32 %s10, 1
    %s16 = ssub.s32 %s10, 2
    %s17 = sadd.s32 %s10, 1
    %s18 = ssub.s32 %s10, %s17
    %p19 = scmp.eq.s32.totalorder %s18, 0
    %s21 = sadd.s32 %s20, 1
    %s22 = scalar_select %p19, %s20, %s21
    %p25 = pneg %p19
    %p26 = scmp.eq.s32.totalorder %s10, 1
    %p27 = por %p25, %p26
    %p28 = scmp.ne.s32.totalorder %s20, %s23
    %p29 = scmp.eq.s32.totalorder %s10, 0
    %p30 = por %p28, %p29
    %p31 = scmp.ne.s32.totalorder %s20, %s23
    %p32 = scmp.eq.s32.totalorder %s15, 1
    %p33 = por %p31, %p32
    %p34 = scmp.ne.s32.totalorder %s23, %s24
    %p35 = scmp.eq.s32.totalorder %s15, 0
    %p36 = por %p34, %p35
    %p37 = scmp.ne.s32.totalorder %s23, %s24
    %p38 = scmp.eq.s32.totalorder %s16, 1
    %p39 = por %p37, %p38
    %p41 = scmp.ne.s32.totalorder %s24, %s40
    %p42 = scmp.eq.s32.totalorder %s16, 0
    %p43 = por %p41, %p42
    %s45 = sadd.s32 %s44, 1
    %p48 = scmp.eq.s32.totalorder %s10, 1
    %p49 = scmp.ne.s32.totalorder %s44, %s46
    %p50 = scmp.eq.s32.totalorder %s10, 0
    %p51 = por %p49, %p50
    %p52 = scmp.ne.s32.totalorder %s44, %s46
    %p53 = scmp.eq.s32.totalorder %s15, 1
    %p54 = por %p52, %p53
    %p55 = scmp.ne.s32.totalorder %s46, %s47
    %p56 = scmp.eq.s32.totalorder %s15, 0
    %p57 = por %p55, %p56
    %p58 = scmp.ne.s32.totalorder %s46, %s47
    %p59 = scmp.eq.s32.totalorder %s16, 1
    %p60 = por %p58, %p59
    %p62 = scmp.ne.s32.totalorder %s47, %s61
    %p63 = scmp.eq.s32.totalorder %s16, 0
    %p64 = por %p62, %p63
    %s65 = ssub.s32 %s10, %s17
    %p66 = scmp.eq.s32.totalorder %s65, 0
    %s68 = sadd.s32 %s67, 1
    %s69 = scalar_select %p66, %s67, %s68
    %p72 = pneg %p66
    %p73 = scmp.eq.s32.totalorder %s10, 1
    %p74 = por %p72, %p73
    %p75 = scmp.ne.s32.totalorder %s67, %s70
    %p76 = scmp.eq.s32.totalorder %s10, 0
    %p77 = por %p75, %p76
    %p78 = scmp.ne.s32.totalorder %s67, %s70
    %p79 = scmp.eq.s32.totalorder %s15, 1
    %p80 = por %p78, %p79
    %p81 = scmp.ne.s32.totalorder %s70, %s71
    %p82 = scmp.eq.s32.totalorder %s15, 0
    %p83 = por %p81, %p82
    %p84 = scmp.ne.s32.totalorder %s70, %s71
    %p85 = scmp.eq.s32.totalorder %s16, 1
    %p86 = por %p84, %p85
    %p88 = scmp.ne.s32.totalorder %s71, %s87
    %p89 = scmp.eq.s32.totalorder %s16, 0
    %p90 = por %p88, %p89
    %s91 = ssub.s32 %s10, %s17
    %p92 = scmp.eq.s32.totalorder %s91, 0
    %s94 = sadd.s32 %s93, 1
    %s95 = scalar_select %p92, %s93, %s94
    %p98 = pneg %p92
    %p99 = scmp.eq.s32.totalorder %s10, 1
    %p100 = por %p98, %p99
    %p101 = scmp.ne.s32.totalorder %s93, %s96
    %p102 = scmp.eq.s32.totalorder %s10, 0
    %p103 = por %p101, %p102
    %p104 = scmp.ne.s32.totalorder %s93, %s96
    %p105 = scmp.eq.s32.totalorder %s15, 1
    %p106 = por %p104, %p105
    %p107 = scmp.ne.s32.totalorder %s96, %s97
    %p108 = scmp.eq.s32.totalorder %s15, 0
    %p109 = por %p107, %p108
    %p110 = scmp.ne.s32.totalorder %s96, %s97
    %p111 = scmp.eq.s32.totalorder %s16, 1
    %p112 = por %p110, %p111
    %p114 = scmp.ne.s32.totalorder %s97, %s113
    %p115 = scmp.eq.s32.totalorder %s16, 0
    %p116 = por %p114, %p115
    %p117 = scmp.le.s32.totalorder 1, %s10
    %p118 = scmp.lt.s32.totalorder %s10, 3
    %p119 = pnand %p117, %p118
    %p120 = pneg %p119
    // Predicated region
    $region9: #{res_sect_forward.10} parent=5 // pred_check
      _
    $region10: #{res_sect_forward.10} parent=5 // pred_check_branch
      %122 = sbr.rel (%p119) target = $region12
    $region11: #{res_sect_forward.10} parent=5 // pred_region
      %s123 = ssub.s32 %s10, 1
      // Predicated region
      $region13: #{res_sect_forward.10} parent=11 // pred_check
        %p124 = pneg %p57
      $region14: #{res_sect_forward.10} parent=11 // pred_check_branch
        %126 = sbr.rel (%p124) target = $region16
      $region15: #{res_sect_forward.10} parent=11 // pred_region
        _
      $region16: #{res_sect_forward.10} parent=11 // pred_fallthru
        _
    $region12: #{res_sect_forward.10} parent=5 // pred_fallthru
      _
    %p127 = scmp.lt.s32.totalorder %s10, 2
    // Predicated region
    $region17: #{res_sect_forward.10} parent=5 // pred_check
      %p128 = pneg %p127
    $region18: #{res_sect_forward.10} parent=5 // pred_check_branch
      %130 = sbr.rel (%p128) target = $region20
    $region19: #{res_sect_forward.10} parent=5 // pred_region
      // Predicated region
      $region21: #{res_sect_forward.10} parent=19 // pred_check
        %p131 = pneg %p30
      $region22: #{res_sect_forward.10} parent=19 // pred_check_branch
        %133 = sbr.rel (%p131) target = $region24
      $region23: #{res_sect_forward.10} parent=19 // pred_region
        %s134 = smul.u32 8, %s10
        %p135 = scmp.lt.s32.totalorder %s134, 15
        %s136 = scalar_select %p135, %s134, 15
        %s137 = smul.addr %s136, 4
        %s138 = scalar_lea.vmem %s0, %s137
        %s139 = smul.u32 8, %s10
      $region24: #{res_sect_forward.10} parent=19 // pred_fallthru
        _
    $region20: #{res_sect_forward.10} parent=5 // pred_fallthru
      _
    %p140 = scmp.le.s32.totalorder 1, %s10
    %p141 = scmp.lt.s32.totalorder %s10, 3
    %p142 = pnand %p140, %p141
    %p143 = pneg %p142
    // Predicated region
    $region25: #{res_sect_forward.10} parent=5 // pred_check
      _
    $region26: #{res_sect_forward.10} parent=5 // pred_check_branch
      %145 = sbr.rel (%p142) target = $region28
    $region27: #{res_sect_forward.10} parent=5 // pred_region
      %s146 = ssub.s32 %s10, 1
      %s147 = smul.u32 8, %s15
      %p148 = scmp.lt.s32.totalorder %s147, 15
      %s149 = scalar_select %p148, %s147, 15
      %s150 = smul.addr %s149, 4
      %s151 = scalar_lea.vmem %s0, %s150
      %p152 = pneg %p36
      %p153 = pneg %p33
      %p154 = pneg %p57
      %p155 = pneg %p54
      %p156 = pneg %p83
      %p157 = pneg %p80
      %s158 = smul.u32 8, %s15
      %p159 = scmp.lt.s32.totalorder %s158, 15
      %s160 = scalar_select %p159, %s158, 15
      %s161 = smul.addr %s160, 8
      %s162 = scalar_lea.vmem %s2, %s161
      %p163 = pneg %p109
      %p164 = pneg %p106
      %p165 = scmp.lt.s32.totalorder %s15, 1
      %s166 = scalar_select %p165, %s15, 1
      %s167 = smul.addr %s166, 2
      %s168 = scalar_lea.vmem %s3, %s167
      %s169 = smul.u32 8, %s15
      %p170 = scmp.lt.s32.totalorder %s169, 15
      %s171 = scalar_select %p170, %s169, 15
      %s172 = smul.addr %s171, 4
      %s173 = scalar_lea.vmem %s0, %s172
      %s174 = smul.u32 8, %s15
      %s175 = smul.u32 8, %s15
      %p176 = scmp.lt.s32.totalorder %s175, 15
      %s177 = scalar_select %p176, %s175, 15
      %s178 = smul.addr %s177, 8
      %s179 = scalar_lea.vmem %s2, %s178
      %s180 = smul.u32 8, %s15
      %p181 = scmp.lt.s32.totalorder %s15, 1
      %s182 = scalar_select %p181, %s15, 1
      %s183 = smul.addr %s182, 2
      %s184 = scalar_lea.vmem %s3, %s183
      %v185 = vld [vmem:[%s173] sm:$0xf]
      %v186 = vld [vmem:[%s173 + $0x4] sm:$0xf]
      %v187 = vld [vmem:[%s173 + $0x8] sm:$0xf]
      %v188 = vld [vmem:[%s173 + $0xc] sm:$0xf]
      %v189 = vld [vmem:[%s173 + $0x10] sm:$0xf]
      %v190 = vld [vmem:[%s173 + $0x14] sm:$0xf]
      %v191 = vld [vmem:[%s173 + $0x18] sm:$0xf]
      %v192 = vld [vmem:[%s173 + $0x1c] sm:$0xf]
      %v193 = vld [vmem:[%s1] sm:$0xf]
      %v194 = vld [vmem:[%s1 + $0x4] sm:$0xf]
      %v195 = vld [vmem:[%s1 + $0x8] sm:$0xf]
      %v196 = vld [vmem:[%s1 + $0xc] sm:$0xf]
      %v197 = vld [vmem:[%s1 + $0x10] sm:$0xf]
      %v198 = vld [vmem:[%s1 + $0x14] sm:$0xf]
      %v199 = vld [vmem:[%s1 + $0x18] sm:$0xf]
      %v200 = vld [vmem:[%s1 + $0x1c] sm:$0xf]
      %v201 = vld [vmem:[%s1 + $0x20] sm:$0xf]
      %v202 = vld [vmem:[%s1 + $0x24] sm:$0xf]
      %v203 = vld [vmem:[%s1 + $0x28] sm:$0xf]
      %v204 = vld [vmem:[%s1 + $0x2c] sm:$0xf]
      %v205 = vld [vmem:[%s1 + $0x30] sm:$0xf]
      %v206 = vld [vmem:[%s1 + $0x34] sm:$0xf]
      %v207 = vld [vmem:[%s1 + $0x38] sm:$0xf]
      %v208 = vld [vmem:[%s1 + $0x3c] sm:$0xf]
      %v217 = vunpack.c.l.b16 %v185
      %v218 = vunpack.c.l.b16 %v186
      %v219 = vunpack.c.l.b16 %v187
      %v220 = vunpack.c.l.b16 %v188
      %v221 = vunpack.c.l.b16 %v189
      %v222 = vunpack.c.l.b16 %v190
      %v223 = vunpack.c.l.b16 %v191
      %v224 = vunpack.c.l.b16 %v192
      %v225 = vpack.c.b16 %v218, %v217
      %v226 = vpack.c.b16 %v220, %v219
      %v227 = vpack.c.b16 %v222, %v221
      %v228 = vpack.c.b16 %v224, %v223
      %v249 = vunpack.c.l.b16 %v193
      %v250 = vunpack.c.l.b16 %v194
      %v251 = vunpack.c.l.b16 %v195
      %v252 = vunpack.c.l.b16 %v196
      %v253 = vunpack.c.l.b16 %v197
      %v254 = vunpack.c.l.b16 %v198
      %v255 = vunpack.c.l.b16 %v199
      %v256 = vunpack.c.l.b16 %v200
      %v257 = vunpack.c.l.b16 %v201
      %v258 = vunpack.c.l.b16 %v202
      %v259 = vunpack.c.l.b16 %v203
      %v260 = vunpack.c.l.b16 %v204
      %v261 = vunpack.c.l.b16 %v205
      %v262 = vunpack.c.l.b16 %v206
      %v263 = vunpack.c.l.b16 %v207
      %v264 = vunpack.c.l.b16 %v208
      %v265 = vpack.c.b16 %v250, %v249
      %v266 = vpack.c.b16 %v252, %v251
      %v267 = vpack.c.b16 %v254, %v253
      %v268 = vpack.c.b16 %v256, %v255
      %v269 = vpack.c.b16 %v258, %v257
      %v270 = vpack.c.b16 %v260, %v259
      %v271 = vpack.c.b16 %v262, %v261
      %v272 = vpack.c.b16 %v264, %v263
      %281 = vmatpush.bf16.msra.mxu0 %v272
      %282 = vmatpush.bf16.msra.mxu0 %v271
      %283 = vmatpush.bf16.msra.mxu0 %v270
      %284 = vmatpush.bf16.msra.mxu0 %v269
      %285 = vmatpush.bf16.msra.mxu0 %v268
      %286 = vmatpush.bf16.msra.mxu0 %v267
      %287 = vmatpush.bf16.msra.mxu0 %v266
      %288 = vmatpush.bf16.msra.mxu0 %v265
      %289 = vmatmul.bf16.gmra.mxu0 %v225
      %v290 = vpop.f32.mrf.mxu0
      %v291 = vadd.f32 0.0, %v290
      %v292 = vpop.f32.mrf.mxu0
      %v293 = vadd.f32 0.0, %v292
      %294 = vmatmul.bf16.gmra.mxu0 %v226
      %v295 = vpop.f32.mrf.mxu0
      %v296 = vadd.f32 0.0, %v295
      %v297 = vpop.f32.mrf.mxu0
      %v298 = vadd.f32 0.0, %v297
      %299 = vmatmul.bf16.gmra.mxu0 %v227
      %v300 = vpop.f32.mrf.mxu0
      %v301 = vadd.f32 0.0, %v300
      %v302 = vpop.f32.mrf.mxu0
      %v303 = vadd.f32 0.0, %v302
      %304 = vmatmul.bf16.gmra.mxu0 %v228
      %v305 = vpop.f32.mrf.mxu0
      %v306 = vadd.f32 0.0, %v305
      %v307 = vpop.f32.mrf.mxu0
      %v308 = vadd.f32 0.0, %v307
      %309 = vdwg.mxu0
      %vm310 = vcmask 64512
      %311 = vst.msk [vmem:[%s179] sm:$0xff] %vm310, %v291
      %312 = vst.msk [vmem:[%s179 + $0x8] sm:$0xff] %vm310, %v293
      %313 = vst.msk [vmem:[%s179 + $0x10] sm:$0xff] %vm310, %v296
      %314 = vst.msk [vmem:[%s179 + $0x18] sm:$0xff] %vm310, %v298
      %315 = vst.msk [vmem:[%s179 + $0x20] sm:$0xff] %vm310, %v301
      %316 = vst.msk [vmem:[%s179 + $0x28] sm:$0xff] %vm310, %v303
      %317 = vst.msk [vmem:[%s179 + $0x30] sm:$0xff] %vm310, %v306
      %318 = vst.msk [vmem:[%s179 + $0x38] sm:$0xff] %vm310, %v308
      %v319 = vsel %vm310, %v291, 0.0
      %v320 = vsel %vm310, %v293, 0.0
      %v321 = vadd.f32 %v319, %v320
      %v322 = vsel %vm310, %v296, 0.0
      %v323 = vadd.f32 %v321, %v322
      %v324 = vsel %vm310, %v298, 0.0
      %v325 = vadd.f32 %v323, %v324
      %v326 = vsel %vm310, %v301, 0.0
      %v327 = vadd.f32 %v325, %v326
      %v328 = vsel %vm310, %v303, 0.0
      %v329 = vadd.f32 %v327, %v328
      %v330 = vsel %vm310, %v306, 0.0
      %v331 = vadd.f32 %v329, %v330
      %v332 = vsel %vm310, %v308, 0.0
      %v333 = vadd.f32 %v331, %v332
      %v334 = vrot.slane %v333, 4
      %v335 = vadd.f32 %v333, %v334
      %v336 = vrot.slane %v335, 2
      %v337 = vadd.f32 %v335, %v336
      %v338 = vrot.slane %v337, 1
      %v339 = vadd.f32 %v337, %v338
      %v340 = vmul.f32 %v339, 0.015625
      %v341 = vsub.f32 %v291, %v340
      %v342 = vsub.f32 %v293, %v340
      %v343 = vsub.f32 %v296, %v340
      %v344 = vsub.f32 %v298, %v340
      %v345 = vsub.f32 %v301, %v340
      %v346 = vsub.f32 %v303, %v340
      %v347 = vsub.f32 %v306, %v340
      %v348 = vsub.f32 %v308, %v340
      %v349 = vmul.f32 %v341, %v341
      %v350 = vmul.f32 %v342, %v342
      %v351 = vmul.f32 %v343, %v343
      %v352 = vmul.f32 %v344, %v344
      %v353 = vmul.f32 %v345, %v345
      %v354 = vmul.f32 %v346, %v346
      %v355 = vmul.f32 %v347, %v347
      %v356 = vmul.f32 %v348, %v348
      %v357 = vsel %vm310, %v349, 0.0
      %v358 = vsel %vm310, %v350, 0.0
      %v359 = vadd.f32 %v357, %v358
      %v360 = vsel %vm310, %v351, 0.0
      %v361 = vadd.f32 %v359, %v360
      %v362 = vsel %vm310, %v352, 0.0
      %v363 = vadd.f32 %v361, %v362
      %v364 = vsel %vm310, %v353, 0.0
      %v365 = vadd.f32 %v363, %v364
      %v366 = vsel %vm310, %v354, 0.0
      %v367 = vadd.f32 %v365, %v366
      %v368 = vsel %vm310, %v355, 0.0
      %v369 = vadd.f32 %v367, %v368
      %v370 = vsel %vm310, %v356, 0.0
      %v371 = vadd.f32 %v369, %v370
      %v372 = vrot.slane %v371, 4
      %v373 = vadd.f32 %v371, %v372
      %v374 = vrot.slane %v373, 2
      %v375 = vadd.f32 %v373, %v374
      %v376 = vrot.slane %v375, 1
      %v377 = vadd.f32 %v375, %v376
      %vm378 = vcmask 1040384
      %v379 = vsel %vm378, %v339, %v377
      %vm380 = vcmask 58368
      %381 = vst.msk [vmem:[%s184] sm:$0x3] %vm380, %v379
      %s382 = smul.u32 8, %s15
      %p383 = scmp.lt.s32.totalorder %s382, 15
      %s384 = scalar_select %p383, %s382, 15
      %s385 = smul.addr %s384, 8
      %s386 = scalar_lea.vmem %s2, %s385
      %p387 = scmp.lt.s32.totalorder %s15, 1
      %s388 = scalar_select %p387, %s15, 1
      %s389 = smul.addr %s388, 2
      %s390 = scalar_lea.vmem %s3, %s389
      // Predicated region
      $region29: #{res_sect_forward.10} parent=27 // pred_check
        %p391 = pneg %p80
      $region30: #{res_sect_forward.10} parent=27 // pred_check_branch
        %393 = sbr.rel (%p391) target = $region32
      $region31: #{res_sect_forward.10} parent=27 // pred_region
        %s394 = smul.u32 8, %s15
      $region32: #{res_sect_forward.10} parent=27 // pred_fallthru
        _
      // Predicated region
      $region33: #{res_sect_forward.10} parent=27 // pred_check
        %p395 = pneg %p106
      $region34: #{res_sect_forward.10} parent=27 // pred_check_branch
        %397 = sbr.rel (%p395) target = $region36
      $region35: #{res_sect_forward.10} parent=27 // pred_region
        _
      $region36: #{res_sect_forward.10} parent=27 // pred_fallthru
        _
    $region28: #{res_sect_forward.10} parent=5 // pred_fallthru
      _
    %p398 = scmp.le.s32.totalorder 2, %s10
    // Predicated region
    $region37: #{res_sect_forward.10} parent=5 // pred_check
      %p399 = pneg %p398
    $region38: #{res_sect_forward.10} parent=5 // pred_check_branch
      %401 = sbr.rel (%p399) target = $region40
    $region39: #{res_sect_forward.10} parent=5 // pred_region
      %s402 = ssub.s32 %s10, 2
      // Predicated region
      $region41: #{res_sect_forward.10} parent=39 // pred_check
        %p403 = pneg %p86
      $region42: #{res_sect_forward.10} parent=39 // pred_check_branch
        %405 = sbr.rel (%p403) target = $region44
      $region43: #{res_sect_forward.10} parent=39 // pred_region
        %s406 = smul.u32 8, %s16
        %p407 = scmp.lt.s32.totalorder %s406, 15
        %s408 = scalar_select %p407, %s406, 15
        %s409 = smul.addr %s408, 8
        %s410 = scalar_lea.vmem %s2, %s409
      $region44: #{res_sect_forward.10} parent=39 // pred_fallthru
        _
      // Predicated region
      $region45: #{res_sect_forward.10} parent=39 // pred_check
        %p411 = pneg %p112
      $region46: #{res_sect_forward.10} parent=39 // pred_check_branch
        %413 = sbr.rel (%p411) target = $region48
      $region47: #{res_sect_forward.10} parent=39 // pred_region
        %p414 = scmp.lt.s32.totalorder %s16, 1
        %s415 = scalar_select %p414, %s16, 1
        %s416 = smul.addr %s415, 2
        %s417 = scalar_lea.vmem %s3, %s416
      $region48: #{res_sect_forward.10} parent=39 // pred_fallthru
        _
    $region40: #{res_sect_forward.10} parent=5 // pred_fallthru
      _
  $region6: #{res_sect_forward.10} parent=0 // loop_footer
    %s14 = sadd.s32 1, %s10
  $region7: #{res_sect_forward.10} parent=0 // loop_footer_branch
    %9 = sbr.rel target = $region3
  $region8: #{res_sect_forward.10} parent=0 // loop_exit
    _

// kernel: res_sect_forward.11
$region0: #{res_sect_forward.11}
  #allocation0 [shape = 'u32[]', space=smem, size = 0x4, offset = 0x4, fixed_abs, tag = 'smem constant byte address 0x4 - core index']
  #allocation1 [shape = 'u32[72,128]{1,0:T(1,128)}', space=vmem, size = 0x9000, scoped, tag = 'internal scratch']
  %s0 = inlined_call_operand.vmem [shape: f32[128,8], index: 0, kind: input, shape index: {}]
  %s1 = inlined_call_operand.vmem [shape: f32[2,8], index: 1, kind: input, shape index: {}]
  %s2 = inlined_call_operand.vmem [shape: f32[128,8], index: 2, kind: output, shape index: {}]
  %s3 = sld [smem:[#allocation0]]
  $region41: #{res_sect_forward.11} parent=0
    _
  %s5 = ssub.s32 1, %s3
  %s6 = scalar_select 0, %s5, %s3
  loop: start=0, step=1, limit=4
  $region2: #{res_sect_forward.11} parent=0 // loop_pre_header
    _
  $region3: #{res_sect_forward.11} parent=0 // loop_header
    %s8 = sphi 0, %s12
    %p9 = scmp.ge.s32.totalorder %s8, 4
    %s18 = sphi 0, %s20
    %s21 = sphi 0, %s18
    %s22 = sphi 0, %s21
    %s38 = sphi 0, %s22
    %s42 = sphi 0, %s42
    %s44 = sphi 0, %s42
    %s45 = sphi 0, %s44
    %s59 = sphi 0, %s45
    %s65 = sphi 0, %s67
    %s68 = sphi 0, %s65
    %s69 = sphi 0, %s68
    %s85 = sphi 0, %s69
  $region4: #{res_sect_forward.11} parent=0 // loop_header_branch
    %11 = sbr.rel (%p9) target = $region8
  $region5: #{res_sect_forward.11} parent=0 // loop_body
    %s13 = ssub.s32 %s8, 1
    %s14 = ssub.s32 %s8, 2
    %s15 = sadd.s32 %s8, 1
    %s16 = ssub.s32 %s8, %s15
    %p17 = scmp.eq.s32.totalorder %s16, 0
    %s19 = sadd.s32 %s18, 1
    %s20 = scalar_select %p17, %s18, %s19
    %p23 = pneg %p17
    %p24 = scmp.eq.s32.totalorder %s8, 1
    %p25 = por %p23, %p24
    %p26 = scmp.ne.s32.totalorder %s18, %s21
    %p27 = scmp.eq.s32.totalorder %s8, 0
    %p28 = por %p26, %p27
    %p29 = scmp.ne.s32.totalorder %s18, %s21
    %p30 = scmp.eq.s32.totalorder %s13, 1
    %p31 = por %p29, %p30
    %p32 = scmp.ne.s32.totalorder %s21, %s22
    %p33 = scmp.eq.s32.totalorder %s13, 0
    %p34 = por %p32, %p33
    %p35 = scmp.ne.s32.totalorder %s21, %s22
    %p36 = scmp.eq.s32.totalorder %s14, 1
    %p37 = por %p35, %p36
    %p39 = scmp.ne.s32.totalorder %s22, %s38
    %p40 = scmp.eq.s32.totalorder %s14, 0
    %p41 = por %p39, %p40
    %s43 = sadd.s32 %s42, 1
    %p46 = scmp.eq.s32.totalorder %s8, 1
    %p47 = scmp.ne.s32.totalorder %s42, %s44
    %p48 = scmp.eq.s32.totalorder %s8, 0
    %p49 = por %p47, %p48
    %p50 = scmp.ne.s32.totalorder %s42, %s44
    %p51 = scmp.eq.s32.totalorder %s13, 1
    %p52 = por %p50, %p51
    %p53 = scmp.ne.s32.totalorder %s44, %s45
    %p54 = scmp.eq.s32.totalorder %s13, 0
    %p55 = por %p53, %p54
    %p56 = scmp.ne.s32.totalorder %s44, %s45
    %p57 = scmp.eq.s32.totalorder %s14, 1
    %p58 = por %p56, %p57
    %p60 = scmp.ne.s32.totalorder %s45, %s59
    %p61 = scmp.eq.s32.totalorder %s14, 0
    %p62 = por %p60, %p61
    %s63 = ssub.s32 %s8, %s15
    %p64 = scmp.eq.s32.totalorder %s63, 0
    %s66 = sadd.s32 %s65, 1
    %s67 = scalar_select %p64, %s65, %s66
    %p70 = pneg %p64
    %p71 = scmp.eq.s32.totalorder %s8, 1
    %p72 = por %p70, %p71
    %p73 = scmp.ne.s32.totalorder %s65, %s68
    %p74 = scmp.eq.s32.totalorder %s8, 0
    %p75 = por %p73, %p74
    %p76 = scmp.ne.s32.totalorder %s65, %s68
    %p77 = scmp.eq.s32.totalorder %s13, 1
    %p78 = por %p76, %p77
    %p79 = scmp.ne.s32.totalorder %s68, %s69
    %p80 = scmp.eq.s32.totalorder %s13, 0
    %p81 = por %p79, %p80
    %p82 = scmp.ne.s32.totalorder %s68, %s69
    %p83 = scmp.eq.s32.totalorder %s14, 1
    %p84 = por %p82, %p83
    %p86 = scmp.ne.s32.totalorder %s69, %s85
    %p87 = scmp.eq.s32.totalorder %s14, 0
    %p88 = por %p86, %p87
    %p89 = scmp.le.s32.totalorder 1, %s8
    %p90 = scmp.lt.s32.totalorder %s8, 3
    %p91 = pnand %p89, %p90
    %p92 = pneg %p91
    // Predicated region
    $region9: #{res_sect_forward.11} parent=5 // pred_check
      _
    $region10: #{res_sect_forward.11} parent=5 // pred_check_branch
      %94 = sbr.rel (%p91) target = $region12
    $region11: #{res_sect_forward.11} parent=5 // pred_region
      %s95 = ssub.s32 %s8, 1
      // Predicated region
      $region13: #{res_sect_forward.11} parent=11 // pred_check
        %p96 = pneg %p55
      $region14: #{res_sect_forward.11} parent=11 // pred_check_branch
        %98 = sbr.rel (%p96) target = $region16
      $region15: #{res_sect_forward.11} parent=11 // pred_region
        _
      $region16: #{res_sect_forward.11} parent=11 // pred_fallthru
        _
    $region12: #{res_sect_forward.11} parent=5 // pred_fallthru
      _
    %p99 = scmp.lt.s32.totalorder %s8, 2
    // Predicated region
    $region17: #{res_sect_forward.11} parent=5 // pred_check
      %p100 = pneg %p99
    $region18: #{res_sect_forward.11} parent=5 // pred_check_branch
      %102 = sbr.rel (%p100) target = $region20
    $region19: #{res_sect_forward.11} parent=5 // pred_region
      // Predicated region
      $region21: #{res_sect_forward.11} parent=19 // pred_check
        %p103 = pneg %p28
      $region22: #{res_sect_forward.11} parent=19 // pred_check_branch
        %105 = sbr.rel (%p103) target = $region24
      $region23: #{res_sect_forward.11} parent=19 // pred_region
        %s106 = smul.u32 8, %s8
        %p107 = scmp.lt.s32.totalorder %s106, 15
        %s108 = scalar_select %p107, %s106, 15
        %s109 = smul.addr %s108, 8
        %s110 = scalar_lea.vmem %s0, %s109
        %s111 = smul.u32 8, %s8
      $region24: #{res_sect_forward.11} parent=19 // pred_fallthru
        _
    $region20: #{res_sect_forward.11} parent=5 // pred_fallthru
      _
    %p112 = scmp.le.s32.totalorder 1, %s8
    %p113 = scmp.lt.s32.totalorder %s8, 3
    %p114 = pnand %p112, %p113
    %p115 = pneg %p114
    // Predicated region
    $region25: #{res_sect_forward.11} parent=5 // pred_check
      _
    $region26: #{res_sect_forward.11} parent=5 // pred_check_branch
      %117 = sbr.rel (%p114) target = $region28
    $region27: #{res_sect_forward.11} parent=5 // pred_region
      %s118 = ssub.s32 %s8, 1
      %s119 = smul.u32 8, %s13
      %p120 = scmp.lt.s32.totalorder %s119, 15
      %s121 = scalar_select %p120, %s119, 15
      %s122 = smul.addr %s121, 8
      %s123 = scalar_lea.vmem %s0, %s122
      %p124 = pneg %p34
      %p125 = pneg %p31
      %p126 = pneg %p55
      %p127 = pneg %p52
      %p128 = pneg %p81
      %p129 = pneg %p78
      %s130 = smul.u32 8, %s13
      %p131 = scmp.lt.s32.totalorder %s130, 15
      %s132 = scalar_select %p131, %s130, 15
      %s133 = smul.addr %s132, 8
      %s134 = scalar_lea.vmem %s2, %s133
      %s135 = smul.u32 8, %s13
      %p136 = scmp.lt.s32.totalorder %s135, 15
      %s137 = scalar_select %p136, %s135, 15
      %s138 = smul.addr %s137, 8
      %s139 = scalar_lea.vmem %s0, %s138
      %s140 = smul.u32 8, %s13
      %s141 = smul.u32 8, %s13
      %p142 = scmp.lt.s32.totalorder %s141, 15
      %s143 = scalar_select %p142, %s141, 15
      %s144 = smul.addr %s143, 8
      %s145 = scalar_lea.vmem %s2, %s144
      %s146 = smul.u32 8, %s13
      %v147 = vld [vmem:[%s1] sm:$0x3]
      %v148 = vld [vmem:[%s139] sm:$0xff]
      %v149 = vld [vmem:[%s139 + $0x8] sm:$0xff]
      %v150 = vld [vmem:[%s139 + $0x10] sm:$0xff]
      %v151 = vld [vmem:[%s139 + $0x18] sm:$0xff]
      %v152 = vld [vmem:[%s139 + $0x20] sm:$0xff]
      %v153 = vld [vmem:[%s139 + $0x28] sm:$0xff]
      %v154 = vld [vmem:[%s139 + $0x30] sm:$0xff]
      %v155 = vld [vmem:[%s139 + $0x38] sm:$0xff]
      %v156 = vperm.slane %v147, 0
      %v157 = vmul.f32 %v148, %v156
      %v158 = vmul.f32 %v149, %v156
      %v159 = vmul.f32 %v150, %v156
      %v160 = vmul.f32 %v151, %v156
      %v161 = vmul.f32 %v152, %v156
      %v162 = vmul.f32 %v153, %v156
      %v163 = vmul.f32 %v154, %v156
      %v164 = vmul.f32 %v155, %v156
      %v165 = vperm.slane %v147, 1
      %v166 = vadd.f32 %v157, %v165
      %v167 = vadd.f32 %v158, %v165
      %v168 = vadd.f32 %v159, %v165
      %v169 = vadd.f32 %v160, %v165
      %v170 = vadd.f32 %v161, %v165
      %v171 = vadd.f32 %v162, %v165
      %v172 = vadd.f32 %v163, %v165
      %v173 = vadd.f32 %v164, %v165
      %v174 = vmax.f32 %v166, 0.0
      %v175 = vmax.f32 %v167, 0.0
      %v176 = vmax.f32 %v168, 0.0
      %v177 = vmax.f32 %v169, 0.0
      %v178 = vmax.f32 %v170, 0.0
      %v179 = vmax.f32 %v171, 0.0
      %v180 = vmax.f32 %v172, 0.0
      %v181 = vmax.f32 %v173, 0.0
      %vm182 = vcmask 64512
      %183 = vst.msk [vmem:[%s145] sm:$0xff] %vm182, %v174
      %184 = vst.msk [vmem:[%s145 + $0x8] sm:$0xff] %vm182, %v175
      %185 = vst.msk [vmem:[%s145 + $0x10] sm:$0xff] %vm182, %v176
      %186 = vst.msk [vmem:[%s145 + $0x18] sm:$0xff] %vm182, %v177
      %187 = vst.msk [vmem:[%s145 + $0x20] sm:$0xff] %vm182, %v178
      %188 = vst.msk [vmem:[%s145 + $0x28] sm:$0xff] %vm182, %v179
      %189 = vst.msk [vmem:[%s145 + $0x30] sm:$0xff] %vm182, %v180
      %190 = vst.msk [vmem:[%s145 + $0x38] sm:$0xff] %vm182, %v181
      %s191 = smul.u32 8, %s13
      %p192 = scmp.lt.s32.totalorder %s191, 15
      %s193 = scalar_select %p192, %s191, 15
      %s194 = smul.addr %s193, 8
      %s195 = scalar_lea.vmem %s2, %s194
      // Predicated region
      $region29: #{res_sect_forward.11} parent=27 // pred_check
        %p196 = pneg %p78
      $region30: #{res_sect_forward.11} parent=27 // pred_check_branch
        %198 = sbr.rel (%p196) target = $region32
      $region31: #{res_sect_forward.11} parent=27 // pred_region
        %s199 = smul.u32 8, %s13
      $region32: #{res_sect_forward.11} parent=27 // pred_fallthru
        _
    $region28: #{res_sect_forward.11} parent=5 // pred_fallthru
      _
    %p200 = scmp.le.s32.totalorder 2, %s8
    // Predicated region
    $region33: #{res_sect_forward.11} parent=5 // pred_check
      %p201 = pneg %p200
    $region34: #{res_sect_forward.11} parent=5 // pred_check_branch
      %203 = sbr.rel (%p201) target = $region36
    $region35: #{res_sect_forward.11} parent=5 // pred_region
      %s204 = ssub.s32 %s8, 2
      // Predicated region
      $region37: #{res_sect_forward.11} parent=35 // pred_check
        %p205 = pneg %p84
      $region38: #{res_sect_forward.11} parent=35 // pred_check_branch
        %207 = sbr.rel (%p205) target = $region40
      $region39: #{res_sect_forward.11} parent=35 // pred_region
        %s208 = smul.u32 8, %s14
        %p209 = scmp.lt.s32.totalorder %s208, 15
        %s210 = scalar_select %p209, %s208, 15
        %s211 = smul.addr %s210, 8
        %s212 = scalar_lea.vmem %s2, %s211
      $region40: #{res_sect_forward.11} parent=35 // pred_fallthru
        _
    $region36: #{res_sect_forward.11} parent=5 // pred_fallthru
      _
  $region6: #{res_sect_forward.11} parent=0 // loop_footer
    %s12 = sadd.s32 1, %s8
  $region7: #{res_sect_forward.11} parent=0 // loop_footer_branch
    %7 = sbr.rel target = $region3
  $region8: #{res_sect_forward.11} parent=0 // loop_exit
    _

// kernel: res_sect_forward.13
$region0: #{res_sect_forward.13}
  #allocation0 [shape = 'u32[]', space=smem, size = 0x4, offset = 0x4, fixed_abs, tag = 'smem constant byte address 0x4 - core index']
  #allocation1 [shape = 'u32[72,128]{1,0:T(1,128)}', space=vmem, size = 0x9000, scoped, tag = 'internal scratch']
  %s0 = inlined_call_operand.vmem [shape: f32[128,8], index: 0, kind: input, shape index: {}]
  %s1 = inlined_call_operand.vmem [shape: f32[2,8], index: 1, kind: input, shape index: {}]
  %s2 = inlined_call_operand.vmem [shape: f32[128,8], index: 2, kind: input, shape index: {}]
  %s3 = inlined_call_operand.vmem [shape: f32[128,8], index: 3, kind: output, shape index: {}]
  %s4 = sld [smem:[#allocation0]]
  $region45: #{res_sect_forward.13} parent=0
    _
  %s6 = ssub.s32 1, %s4
  %s7 = scalar_select 0, %s6, %s4
  loop: start=0, step=1, limit=4
  $region2: #{res_sect_forward.13} parent=0 // loop_pre_header
    _
  $region3: #{res_sect_forward.13} parent=0 // loop_header
    %s9 = sphi 0, %s13
    %p10 = scmp.ge.s32.totalorder %s9, 4
    %s19 = sphi 0, %s21
    %s22 = sphi 0, %s19
    %s23 = sphi 0, %s22
    %s39 = sphi 0, %s23
    %s43 = sphi 0, %s43
    %s45 = sphi 0, %s43
    %s46 = sphi 0, %s45
    %s60 = sphi 0, %s46
    %s66 = sphi 0, %s68
    %s69 = sphi 0, %s66
    %s70 = sphi 0, %s69
    %s86 = sphi 0, %s70
    %s92 = sphi 0, %s94
    %s95 = sphi 0, %s92
    %s96 = sphi 0, %s95
    %s112 = sphi 0, %s96
  $region4: #{res_sect_forward.13} parent=0 // loop_header_branch
    %12 = sbr.rel (%p10) target = $region8
  $region5: #{res_sect_forward.13} parent=0 // loop_body
    %s14 = ssub.s32 %s9, 1
    %s15 = ssub.s32 %s9, 2
    %s16 = sadd.s32 %s9, 1
    %s17 = ssub.s32 %s9, %s16
    %p18 = scmp.eq.s32.totalorder %s17, 0
    %s20 = sadd.s32 %s19, 1
    %s21 = scalar_select %p18, %s19, %s20
    %p24 = pneg %p18
    %p25 = scmp.eq.s32.totalorder %s9, 1
    %p26 = por %p24, %p25
    %p27 = scmp.ne.s32.totalorder %s19, %s22
    %p28 = scmp.eq.s32.totalorder %s9, 0
    %p29 = por %p27, %p28
    %p30 = scmp.ne.s32.totalorder %s19, %s22
    %p31 = scmp.eq.s32.totalorder %s14, 1
    %p32 = por %p30, %p31
    %p33 = scmp.ne.s32.totalorder %s22, %s23
    %p34 = scmp.eq.s32.totalorder %s14, 0
    %p35 = por %p33, %p34
    %p36 = scmp.ne.s32.totalorder %s22, %s23
    %p37 = scmp.eq.s32.totalorder %s15, 1
    %p38 = por %p36, %p37
    %p40 = scmp.ne.s32.totalorder %s23, %s39
    %p41 = scmp.eq.s32.totalorder %s15, 0
    %p42 = por %p40, %p41
    %s44 = sadd.s32 %s43, 1
    %p47 = scmp.eq.s32.totalorder %s9, 1
    %p48 = scmp.ne.s32.totalorder %s43, %s45
    %p49 = scmp.eq.s32.totalorder %s9, 0
    %p50 = por %p48, %p49
    %p51 = scmp.ne.s32.totalorder %s43, %s45
    %p52 = scmp.eq.s32.totalorder %s14, 1
    %p53 = por %p51, %p52
    %p54 = scmp.ne.s32.totalorder %s45, %s46
    %p55 = scmp.eq.s32.totalorder %s14, 0
    %p56 = por %p54, %p55
    %p57 = scmp.ne.s32.totalorder %s45, %s46
    %p58 = scmp.eq.s32.totalorder %s15, 1
    %p59 = por %p57, %p58
    %p61 = scmp.ne.s32.totalorder %s46, %s60
    %p62 = scmp.eq.s32.totalorder %s15, 0
    %p63 = por %p61, %p62
    %s64 = ssub.s32 %s9, %s16
    %p65 = scmp.eq.s32.totalorder %s64, 0
    %s67 = sadd.s32 %s66, 1
    %s68 = scalar_select %p65, %s66, %s67
    %p71 = pneg %p65
    %p72 = scmp.eq.s32.totalorder %s9, 1
    %p73 = por %p71, %p72
    %p74 = scmp.ne.s32.totalorder %s66, %s69
    %p75 = scmp.eq.s32.totalorder %s9, 0
    %p76 = por %p74, %p75
    %p77 = scmp.ne.s32.totalorder %s66, %s69
    %p78 = scmp.eq.s32.totalorder %s14, 1
    %p79 = por %p77, %p78
    %p80 = scmp.ne.s32.totalorder %s69, %s70
    %p81 = scmp.eq.s32.totalorder %s14, 0
    %p82 = por %p80, %p81
    %p83 = scmp.ne.s32.totalorder %s69, %s70
    %p84 = scmp.eq.s32.totalorder %s15, 1
    %p85 = por %p83, %p84
    %p87 = scmp.ne.s32.totalorder %s70, %s86
    %p88 = scmp.eq.s32.totalorder %s15, 0
    %p89 = por %p87, %p88
    %s90 = ssub.s32 %s9, %s16
    %p91 = scmp.eq.s32.totalorder %s90, 0
    %s93 = sadd.s32 %s92, 1
    %s94 = scalar_select %p91, %s92, %s93
    %p97 = pneg %p91
    %p98 = scmp.eq.s32.totalorder %s9, 1
    %p99 = por %p97, %p98
    %p100 = scmp.ne.s32.totalorder %s92, %s95
    %p101 = scmp.eq.s32.totalorder %s9, 0
    %p102 = por %p100, %p101
    %p103 = scmp.ne.s32.totalorder %s92, %s95
    %p104 = scmp.eq.s32.totalorder %s14, 1
    %p105 = por %p103, %p104
    %p106 = scmp.ne.s32.totalorder %s95, %s96
    %p107 = scmp.eq.s32.totalorder %s14, 0
    %p108 = por %p106, %p107
    %p109 = scmp.ne.s32.totalorder %s95, %s96
    %p110 = scmp.eq.s32.totalorder %s15, 1
    %p111 = por %p109, %p110
    %p113 = scmp.ne.s32.totalorder %s96, %s112
    %p114 = scmp.eq.s32.totalorder %s15, 0
    %p115 = por %p113, %p114
    %p116 = scmp.le.s32.totalorder 1, %s9
    %p117 = scmp.lt.s32.totalorder %s9, 3
    %p118 = pnand %p116, %p117
    %p119 = pneg %p118
    // Predicated region
    $region9: #{res_sect_forward.13} parent=5 // pred_check
      _
    $region10: #{res_sect_forward.13} parent=5 // pred_check_branch
      %121 = sbr.rel (%p118) target = $region12
    $region11: #{res_sect_forward.13} parent=5 // pred_region
      %s122 = ssub.s32 %s9, 1
      // Predicated region
      $region13: #{res_sect_forward.13} parent=11 // pred_check
        %p123 = pneg %p56
      $region14: #{res_sect_forward.13} parent=11 // pred_check_branch
        %125 = sbr.rel (%p123) target = $region16
      $region15: #{res_sect_forward.13} parent=11 // pred_region
        _
      $region16: #{res_sect_forward.13} parent=11 // pred_fallthru
        _
    $region12: #{res_sect_forward.13} parent=5 // pred_fallthru
      _
    %p126 = scmp.lt.s32.totalorder %s9, 2
    // Predicated region
    $region17: #{res_sect_forward.13} parent=5 // pred_check
      %p127 = pneg %p126
    $region18: #{res_sect_forward.13} parent=5 // pred_check_branch
      %129 = sbr.rel (%p127) target = $region20
    $region19: #{res_sect_forward.13} parent=5 // pred_region
      // Predicated region
      $region21: #{res_sect_forward.13} parent=19 // pred_check
        %p130 = pneg %p29
      $region22: #{res_sect_forward.13} parent=19 // pred_check_branch
        %132 = sbr.rel (%p130) target = $region24
      $region23: #{res_sect_forward.13} parent=19 // pred_region
        %s133 = smul.u32 8, %s9
        %p134 = scmp.lt.s32.totalorder %s133, 15
        %s135 = scalar_select %p134, %s133, 15
        %s136 = smul.addr %s135, 8
        %s137 = scalar_lea.vmem %s0, %s136
        %s138 = smul.u32 8, %s9
      $region24: #{res_sect_forward.13} parent=19 // pred_fallthru
        _
      // Predicated region
      $region25: #{res_sect_forward.13} parent=19 // pred_check
        %p139 = pneg %p76
      $region26: #{res_sect_forward.13} parent=19 // pred_check_branch
        %141 = sbr.rel (%p139) target = $region28
      $region27: #{res_sect_forward.13} parent=19 // pred_region
        %s142 = smul.u32 8, %s9
        %p143 = scmp.lt.s32.totalorder %s142, 15
        %s144 = scalar_select %p143, %s142, 15
        %s145 = smul.addr %s144, 8
        %s146 = scalar_lea.vmem %s2, %s145
        %s147 = smul.u32 8, %s9
      $region28: #{res_sect_forward.13} parent=19 // pred_fallthru
        _
    $region20: #{res_sect_forward.13} parent=5 // pred_fallthru
      _
    %p148 = scmp.le.s32.totalorder 1, %s9
    %p149 = scmp.lt.s32.totalorder %s9, 3
    %p150 = pnand %p148, %p149
    %p151 = pneg %p150
    // Predicated region
    $region29: #{res_sect_forward.13} parent=5 // pred_check
      _
    $region30: #{res_sect_forward.13} parent=5 // pred_check_branch
      %153 = sbr.rel (%p150) target = $region32
    $region31: #{res_sect_forward.13} parent=5 // pred_region
      %s154 = ssub.s32 %s9, 1
      %s155 = smul.u32 8, %s14
      %p156 = scmp.lt.s32.totalorder %s155, 15
      %s157 = scalar_select %p156, %s155, 15
      %s158 = smul.addr %s157, 8
      %s159 = scalar_lea.vmem %s0, %s158
      %p160 = pneg %p35
      %p161 = pneg %p32
      %p162 = pneg %p56
      %p163 = pneg %p53
      %s164 = smul.u32 8, %s14
      %p165 = scmp.lt.s32.totalorder %s164, 15
      %s166 = scalar_select %p165, %s164, 15
      %s167 = smul.addr %s166, 8
      %s168 = scalar_lea.vmem %s2, %s167
      %p169 = pneg %p82
      %p170 = pneg %p79
      %p171 = pneg %p108
      %p172 = pneg %p105
      %s173 = smul.u32 8, %s14
      %p174 = scmp.lt.s32.totalorder %s173, 15
      %s175 = scalar_select %p174, %s173, 15
      %s176 = smul.addr %s175, 8
      %s177 = scalar_lea.vmem %s3, %s176
      %s178 = smul.u32 8, %s14
      %p179 = scmp.lt.s32.totalorder %s178, 15
      %s180 = scalar_select %p179, %s178, 15
      %s181 = smul.addr %s180, 8
      %s182 = scalar_lea.vmem %s0, %s181
      %s183 = smul.u32 8, %s14
      %s184 = smul.u32 8, %s14
      %p185 = scmp.lt.s32.totalorder %s184, 15
      %s186 = scalar_select %p185, %s184, 15
      %s187 = smul.addr %s186, 8
      %s188 = scalar_lea.vmem %s2, %s187
      %s189 = smul.u32 8, %s14
      %s190 = smul.u32 8, %s14
      %p191 = scmp.lt.s32.totalorder %s190, 15
      %s192 = scalar_select %p191, %s190, 15
      %s193 = smul.addr %s192, 8
      %s194 = scalar_lea.vmem %s3, %s193
      %s195 = smul.u32 8, %s14
      %v196 = vld [vmem:[%s1] sm:$0x3]
      %v197 = vld [vmem:[%s182] sm:$0xff]
      %v198 = vld [vmem:[%s182 + $0x8] sm:$0xff]
      %v199 = vld [vmem:[%s182 + $0x10] sm:$0xff]
      %v200 = vld [vmem:[%s182 + $0x18] sm:$0xff]
      %v201 = vld [vmem:[%s182 + $0x20] sm:$0xff]
      %v202 = vld [vmem:[%s182 + $0x28] sm:$0xff]
      %v203 = vld [vmem:[%s182 + $0x30] sm:$0xff]
      %v204 = vld [vmem:[%s182 + $0x38] sm:$0xff]
      %v205 = vperm.slane %v196, 0
      %v206 = vmul.f32 %v197, %v205
      %v207 = vmul.f32 %v198, %v205
      %v208 = vmul.f32 %v199, %v205
      %v209 = vmul.f32 %v200, %v205
      %v210 = vmul.f32 %v201, %v205
      %v211 = vmul.f32 %v202, %v205
      %v212 = vmul.f32 %v203, %v205
      %v213 = vmul.f32 %v204, %v205
      %v214 = vperm.slane %v196, 1
      %v215 = vadd.f32 %v206, %v214
      %v216 = vadd.f32 %v207, %v214
      %v217 = vadd.f32 %v208, %v214
      %v218 = vadd.f32 %v209, %v214
      %v219 = vadd.f32 %v210, %v214
      %v220 = vadd.f32 %v211, %v214
      %v221 = vadd.f32 %v212, %v214
      %v222 = vadd.f32 %v213, %v214
      %v223 = vld [vmem:[%s188] sm:$0xff]
      %v224 = vld [vmem:[%s188 + $0x8] sm:$0xff]
      %v225 = vld [vmem:[%s188 + $0x10] sm:$0xff]
      %v226 = vld [vmem:[%s188 + $0x18] sm:$0xff]
      %v227 = vld [vmem:[%s188 + $0x20] sm:$0xff]
      %v228 = vld [vmem:[%s188 + $0x28] sm:$0xff]
      %v229 = vld [vmem:[%s188 + $0x30] sm:$0xff]
      %v230 = vld [vmem:[%s188 + $0x38] sm:$0xff]
      %v231 = vadd.f32 %v215, %v223
      %v232 = vadd.f32 %v216, %v224
      %v233 = vadd.f32 %v217, %v225
      %v234 = vadd.f32 %v218, %v226
      %v235 = vadd.f32 %v219, %v227
      %v236 = vadd.f32 %v220, %v228
      %v237 = vadd.f32 %v221, %v229
      %v238 = vadd.f32 %v222, %v230
      %v239 = vmax.f32 %v231, 0.0
      %v240 = vmax.f32 %v232, 0.0
      %v241 = vmax.f32 %v233, 0.0
      %v242 = vmax.f32 %v234, 0.0
      %v243 = vmax.f32 %v235, 0.0
      %v244 = vmax.f32 %v236, 0.0
      %v245 = vmax.f32 %v237, 0.0
      %v246 = vmax.f32 %v238, 0.0
      %vm247 = vcmask 64512
      %248 = vst.msk [vmem:[%s194] sm:$0xff] %vm247, %v239
      %249 = vst.msk [vmem:[%s194 + $0x8] sm:$0xff] %vm247, %v240
      %250 = vst.msk [vmem:[%s194 + $0x10] sm:$0xff] %vm247, %v241
      %251 = vst.msk [vmem:[%s194 + $0x18] sm:$0xff] %vm247, %v242
      %252 = vst.msk [vmem:[%s194 + $0x20] sm:$0xff] %vm247, %v243
      %253 = vst.msk [vmem:[%s194 + $0x28] sm:$0xff] %vm247, %v244
      %254 = vst.msk [vmem:[%s194 + $0x30] sm:$0xff] %vm247, %v245
      %255 = vst.msk [vmem:[%s194 + $0x38] sm:$0xff] %vm247, %v246
      %s256 = smul.u32 8, %s14
      %p257 = scmp.lt.s32.totalorder %s256, 15
      %s258 = scalar_select %p257, %s256, 15
      %s259 = smul.addr %s258, 8
      %s260 = scalar_lea.vmem %s3, %s259
      // Predicated region
      $region33: #{res_sect_forward.13} parent=31 // pred_check
        %p261 = pneg %p105
      $region34: #{res_sect_forward.13} parent=31 // pred_check_branch
        %263 = sbr.rel (%p261) target = $region36
      $region35: #{res_sect_forward.13} parent=31 // pred_region
        %s264 = smul.u32 8, %s14
      $region36: #{res_sect_forward.13} parent=31 // pred_fallthru
        _
    $region32: #{res_sect_forward.13} parent=5 // pred_fallthru
      _
    %p265 = scmp.le.s32.totalorder 2, %s9
    // Predicated region
    $region37: #{res_sect_forward.13} parent=5 // pred_check
      %p266 = pneg %p265
    $region38: #{res_sect_forward.13} parent=5 // pred_check_branch
      %268 = sbr.rel (%p266) target = $region40
    $region39: #{res_sect_forward.13} parent=5 // pred_region
      %s269 = ssub.s32 %s9, 2
      // Predicated region
      $region41: #{res_sect_forward.13} parent=39 // pred_check
        %p270 = pneg %p111
      $region42: #{res_sect_forward.13} parent=39 // pred_check_branch
        %272 = sbr.rel (%p270) target = $region44
      $region43: #{res_sect_forward.13} parent=39 // pred_region
        %s273 = smul.u32 8, %s15
        %p274 = scmp.lt.s32.totalorder %s273, 15
        %s275 = scalar_select %p274, %s273, 15
        %s276 = smul.addr %s275, 8
        %s277 = scalar_lea.vmem %s3, %s276
      $region44: #{res_sect_forward.13} parent=39 // pred_fallthru
        _
    $region40: #{res_sect_forward.13} parent=5 // pred_fallthru
      _
  $region6: #{res_sect_forward.13} parent=0 // loop_footer
    %s13 = sadd.s32 1, %s9
  $region7: #{res_sect_forward.13} parent=0 // loop_footer_branch
    %8 = sbr.rel target = $region3
  $region8: #{res_sect_forward.13} parent=0 // loop_exit
    _

</llo_original>
